<compile_context>
chip_gen: v7x
topology: tpu7x:2x2x1
jax: 0.10.0
libtpu: 0.0.40
codegen_flags: <defaults>
</compile_context>

<pallas_src>
import functools

import numpy as np
import jax
import jax.numpy as jnp
from jax.experimental import pallas as pl
from jax.experimental.pallas import tpu as pltpu


VOXEL_SIZE = (0.2, 0.2, 4.0)
PC_RANGE = (0.0, -40.0, -3.0, 70.4, 40.0, 1.0)
POS_EMB = 32
FEAT_CH = 32
LANE_TILE = 512            # point tile on the lane axis (sweep 512..2048; keep
                           # grid >= 2 blocks on v7x for 2-TC parallelism)
_SENTINEL = np.int32(2 ** 30)   # voxel id for padded points (> any real id)


# -----------------------------------------------------------------------------
# Pallas kernels — transposed, lane-dense layout: point tensors are (C, N)
# -----------------------------------------------------------------------------
def _vfe_stage1_kernel(featT_ref, pmeanT_ref, vcenT_ref,
                       w_pe1_ref, b_pe1_ref, w_pe2_ref, b_pe2_ref,
                       w_f_ref, w_pe_ref, w_c_ref, b_vfe_ref, o_ref):
    """Fused: cluster/center offsets + pos-enc MLP (2x Linear+BN+Tanh) +
    VFE layer 1 (Linear+BN+ReLU) as split-K over the virtual concat."""
    featT = featT_ref[...]                              # (4, TN)  f32
    xyz = featT[:3, :]                                  # (3, TN)
    f_cluster = (xyz - pmeanT_ref[...]).astype(jnp.bfloat16)   # (3, TN)
    f_center = (xyz - vcenT_ref[...]).astype(jnp.bfloat16)     # (3, TN)

    # centroid-aware positional encoding (BN scale pre-folded into weights)
    h = jnp.dot(w_pe1_ref[...], f_cluster,
                preferred_element_type=jnp.float32) + b_pe1_ref[...]
    h = jnp.tanh(h)
    pe = jnp.dot(w_pe2_ref[...], h.astype(jnp.bfloat16),
                 preferred_element_type=jnp.float32) + b_pe2_ref[...]
    pe = jnp.tanh(pe)

    # VFE layer 1: relu(W[:, :4]@feat + W[:, 4:36]@pe + W[:, 36:39]@center + b)
    y = jnp.dot(w_f_ref[...], featT.astype(jnp.bfloat16),
                preferred_element_type=jnp.float32)
    y = y + jnp.dot(w_pe_ref[...], pe.astype(jnp.bfloat16),
                    preferred_element_type=jnp.float32)
    y = y + jnp.dot(w_c_ref[...], f_center,
                    preferred_element_type=jnp.float32)
    y = jnp.maximum(y + b_vfe_ref[...], 0.0)
    o_ref[...] = y.astype(o_ref.dtype)


def _vfe_stage2_kernel(pf_ref, gat_ref, w_a_ref, w_b_ref, b_ref, o_ref):
    """VFE layer 2: relu(W[:, :32]@point_feats + W[:, 32:]@voxel_feat_pp + b)."""
    y = jnp.dot(w_a_ref[...], pf_ref[...], preferred_element_type=jnp.float32)
    y = y + jnp.dot(w_b_ref[...], gat_ref[...], preferred_element_type=jnp.float32)
    y = jnp.maximum(y + b_ref[...], 0.0)
    o_ref[...] = y.astype(o_ref.dtype)


def vfe_stage1(featT, pmeanT, vcenT, w_pe1, b_pe1, w_pe2, b_pe2,
               w_f, w_pe, w_c, b_vfe, tn):
    n_pad = featT.shape[1]
    c = FEAT_CH
    pt = lambda rows: pl.BlockSpec((rows, tn), lambda i: (0, i))
    ws = lambda shp: pl.BlockSpec(shp, lambda i: (0, 0))
    cost = pl.CostEstimate(flops=4736 * n_pad, transcendentals=64 * n_pad,
                           bytes_accessed=104 * n_pad)
    return pl.pallas_call(
        _vfe_stage1_kernel,
        out_shape=jax.ShapeDtypeStruct((c, n_pad), jnp.bfloat16),
        grid=(n_pad // tn,),
        in_specs=[
            pt(4), pt(3), pt(3),
            ws((c, 3)), ws((c, 1)),
            ws((c, c)), ws((c, 1)),
            ws((c, 4)), ws((c, c)), ws((c, 3)), ws((c, 1)),
        ],
        out_specs=pl.BlockSpec((c, tn), lambda i: (0, i)),
        compiler_params=pltpu.CompilerParams(
            dimension_semantics=("parallel",)),
        cost_estimate=cost,
    )(featT, pmeanT, vcenT, w_pe1, b_pe1, w_pe2, b_pe2, w_f, w_pe, w_c, b_vfe)


def vfe_stage2(pf1T, gatT, w_a, w_b, b, tn):
    n_pad = pf1T.shape[1]
    c = FEAT_CH
    cost = pl.CostEstimate(flops=4096 * n_pad, transcendentals=0,
                           bytes_accessed=192 * n_pad)
    return pl.pallas_call(
        _vfe_stage2_kernel,
        out_shape=jax.ShapeDtypeStruct((c, n_pad), jnp.bfloat16),
        grid=(n_pad // tn,),
        in_specs=[
            pl.BlockSpec((c, tn), lambda i: (0, i)),
            pl.BlockSpec((c, tn), lambda i: (0, i)),
            pl.BlockSpec((c, c), lambda i: (0, 0)),
            pl.BlockSpec((c, c), lambda i: (0, 0)),
            pl.BlockSpec((c, 1), lambda i: (0, 0)),
        ],
        out_specs=pl.BlockSpec((c, tn), lambda i: (0, i)),
        compiler_params=pltpu.CompilerParams(
            dimension_semantics=("parallel",)),
        cost_estimate=cost,
    )(pf1T, gatT, w_a, w_b, b)


# -----------------------------------------------------------------------------
# Parameter construction (deterministic, synthetic — no checkpoint).
# Weights stored in torch layout (C_out, C_in) with the inference-mode BN scale
# already folded in; only the per-channel shift (C_out, 1) remains separate.
# -----------------------------------------------------------------------------
def _make_linear_bn_folded(key, c_in, c_out, eps):
    k_w, k_g, k_b = jax.random.split(key, 3)
    w = jax.random.normal(k_w, (c_out, c_in), jnp.float32) / np.sqrt(c_in)
    gamma = jax.random.uniform(k_g, (c_out,), jnp.float32, 0.5, 1.5)
    beta = 0.1 * jax.random.normal(k_b, (c_out,), jnp.float32)
    running_mean = jnp.zeros((c_out,), jnp.float32)
    running_var = jnp.ones((c_out,), jnp.float32)
    scale = gamma / jnp.sqrt(running_var + eps)
    w_folded = w * scale[:, None]
    shift = (beta - running_mean * scale).reshape(c_out, 1)
    return w_folded, shift


def make_params(key, in_channels=4, feat_channels=(32, 32), pos_emb_dims=32):
    keys = jax.random.split(key, 8)
    params = {}
    # cen2point_pos_enc: Linear(3->E)+BN+Tanh, Linear(E->E)+BN+Tanh  (eps=1e-5)
    params["pe1_w"], params["pe1_b"] = _make_linear_bn_folded(
        keys[0], 3, pos_emb_dims, 1e-5)
    params["pe2_w"], params["pe2_b"] = _make_linear_bn_folded(
        keys[1], pos_emb_dims, pos_emb_dims, 1e-5)
    # VFE layers (BN1d eps=1e-3 from norm_cfg)
    full_in = in_channels + pos_emb_dims + 3
    chans = [full_in] + list(feat_channels)
    for i in range(len(chans) - 1):
        c_in = chans[i] * (2 if i > 0 else 1)
        w, b = _make_linear_bn_folded(keys[2 + i], c_in, chans[i + 1], 1e-3)
        params[f"vfe{i + 1}_w"] = w
        params[f"vfe{i + 1}_b"] = b
    return params


# -----------------------------------------------------------------------------
# DynamicVFECustom forward (fully on-device, single jitted program)
# -----------------------------------------------------------------------------
@functools.partial(jax.jit, static_argnames=("tn",))
def _forward_core(features, coors, params, tn):
    vx, vy, vz = VOXEL_SIZE
    x_off = vx / 2 + PC_RANGE[0]
    y_off = vy / 2 + PC_RANGE[1]
    z_off = vz / 2 + PC_RANGE[2]
    canvas_x = round((PC_RANGE[3] - PC_RANGE[0]) / vx)
    canvas_y = round((PC_RANGE[4] - PC_RANGE[1]) / vy)
    canvas_z = round((PC_RANGE[5] - PC_RANGE[2]) / vz)

    n = features.shape[0]
    n_pad = pl.cdiv(n, tn) * tn
    pad = n_pad - n

    features = features.astype(jnp.float32)
    coors = coors.astype(jnp.int32)

    # Linear voxel index per point; padded points get a sentinel id so they
    # collapse into one dummy voxel that the caller slices off.
    lin_idx = (coors[:, 0] * (canvas_z * canvas_y * canvas_x)
               + coors[:, 1] * (canvas_y * canvas_x)
               + coors[:, 2] * canvas_x
               + coors[:, 3])
    features_p = jnp.pad(features, ((0, pad), (0, 0)))
    coors_p = jnp.pad(coors, ((0, pad), (0, 0)))
    lin_p = jnp.concatenate([lin_idx, jnp.full((pad,), _SENTINEL, jnp.int32)])

    # On-device voxel dedup (sort + segment boundaries). Voxels come out sorted
    # by linear voxel index (same voxel set as mmcv's DynamicScatter; ordering
    # convention differs, as documented).
    order = jnp.argsort(lin_p)
    sorted_lin = lin_p[order]
    is_new = jnp.concatenate(
        [jnp.ones((1,), bool), sorted_lin[1:] != sorted_lin[:-1]])
    seg_sorted = jnp.cumsum(is_new.astype(jnp.int32)) - 1
    inv = jnp.zeros((n_pad,), jnp.int32).at[order].set(seg_sorted)
    num_vox = jnp.sum((is_new & (sorted_lin < _SENTINEL)).astype(jnp.int32))
    nv = n_pad                                   # static upper bound on voxels

    voxel_coors = jnp.zeros((nv, 4), jnp.int32).at[inv].set(coors_p)

    # ---- transposed (lane-dense) point tensors: (C, N_pad) ----
    featT = features_p.T                         # (4, n_pad)

    # cluster (centroid) branch — segment mean of xyz.
    # TODO(synk): segment mean/max + voxel->point gather are data-dependent
    # scatter/gather; kept as XLA ops here (a scalar-prefetch Pallas kernel
    # over the sorted points could fuse these as well).
    counts = jnp.zeros((nv,), jnp.float32).at[inv].add(
        jnp.ones((n_pad,), jnp.float32))
    seg_sumT = jnp.zeros((3, nv), jnp.float32).at[:, inv].add(featT[:3])
    voxel_meanT = seg_sumT / jnp.maximum(counts, 1.0)[None, :]
    pmeanT = voxel_meanT[:, inv]                 # (3, n_pad)

    # voxel-center branch: per-point voxel center coords (offset done in-kernel)
    coors_f = coors_p.astype(jnp.float32)
    vcenT = jnp.stack([coors_f[:, 3] * vx + x_off,
                       coors_f[:, 2] * vy + y_off,
                       coors_f[:, 1] * vz + z_off], axis=0)   # (3, n_pad)

    # bf16 MXU operands (BN scale already folded into weights)
    bf = lambda a: a.astype(jnp.bfloat16)
    w1 = params["vfe1_w"]
    pf1T = vfe_stage1(
        featT, pmeanT, vcenT,
        bf(params["pe1_w"]), params["pe1_b"],
        bf(params["pe2_w"]), params["pe2_b"],
        bf(w1[:, :4]), bf(w1[:, 4:4 + POS_EMB]), bf(w1[:, 4 + POS_EMB:]),
        params["vfe1_b"], tn)                    # (32, n_pad) bf16

    # vfe_scatter (mode='max') + map voxel feature back to its points
    vmax1T = jnp.full((FEAT_CH, nv), -jnp.inf,
                      jnp.bfloat16).at[:, inv].max(pf1T)
    gatT = vmax1T[:, inv]                        # (32, n_pad) bf16

    w2 = params["vfe2_w"]
    pf2T = vfe_stage2(pf1T, gatT, bf(w2[:, :FEAT_CH]), bf(w2[:, FEAT_CH:]),
                      params["vfe2_b"], tn)      # (32, n_pad) bf16

    vmax2T = jnp.full((FEAT_CH, nv), -jnp.inf,
                      jnp.float32).at[:, inv].max(pf2T.astype(jnp.float32))
    voxel_feats = vmax2T.T                       # (nv, 32) f32; first num_vox valid
    return voxel_feats, voxel_coors, num_vox


def dynamic_vfe_forward(features, coors, params, tn=LANE_TILE):
    """features: (N, 4) f32, coors: (N, 4) int32 [batch, z, y, x].

    Returns (voxel_feats (M, 32) f32, voxel_coors (M, 4) int32).
    """
    voxel_feats, voxel_coors, num_vox = _forward_core(features, coors,
                                                      params, tn)
    m = int(num_vox)     # single scalar device->host sync for dynamic M
    return voxel_feats[:m], voxel_coors[:m]


# -----------------------------------------------------------------------------
if __name__ == "__main__":
    key = jax.random.PRNGKey(0)
    k_pts, k_int, k_b, k_par = jax.random.split(key, 4)

    N = 200          # points
    BATCH = 2
    # points uniformly inside the point-cloud range
    xyz01 = jax.random.uniform(k_pts, (N, 3), jnp.float32)
    lo = jnp.array(PC_RANGE[:3], jnp.float32)
    hi = jnp.array(PC_RANGE[3:], jnp.float32)
    xyz = lo + xyz01 * (hi - lo)
    intensity = jax.random.uniform(k_int, (N, 1), jnp.float32)
    features = jnp.concatenate([xyz, intensity], axis=1)          # (N, 4)

    batch_idx = jax.random.randint(k_b, (N,), 0, BATCH)
    cx = jnp.clip(jnp.floor((xyz[:, 0] - PC_RANGE[0]) / VOXEL_SIZE[0]), 0, 351)
    cy = jnp.clip(jnp.floor((xyz[:, 1] - PC_RANGE[1]) / VOXEL_SIZE[1]), 0, 399)
    cz = jnp.clip(jnp.floor((xyz[:, 2] - PC_RANGE[2]) / VOXEL_SIZE[2]), 0, 0)
    coors = jnp.stack([batch_idx.astype(jnp.int32),
                       cz.astype(jnp.int32),
                       cy.astype(jnp.int32),
                       cx.astype(jnp.int32)], axis=1)             # (N, 4)

    params = make_params(k_par, in_channels=4, feat_channels=(32, 32),
                         pos_emb_dims=POS_EMB)

    voxel_feats, voxel_coors = dynamic_vfe_forward(features, coors, params)
    jax.block_until_ready(voxel_feats)
    jax.block_until_ready(voxel_coors)

    assert voxel_feats.shape[1] == 32 and voxel_coors.shape[1] == 4
    assert voxel_feats.shape[0] == voxel_coors.shape[0]
    assert voxel_feats.shape[0] > 0
    assert bool(jnp.all(jnp.isfinite(voxel_feats)))
    print("KERNEL_OK")
</pallas_src>

<mosaic_0001>
module attributes {stable_mosaic.version = 11 : i64} {
  func.func private @main(%arg0: i32) attributes {dimension_semantics = [#tpu.dimension_semantics<core_parallel>], iteration_bounds = array<i64: 2>, tpu.core_type = #tpu.core_type<sc_scalar_subcore>, window_params = []} {
    return
  }
}

module attributes {stable_mosaic.version = 11 : i64} {
  func.func private @main(%arg0: i32) attributes {dimension_semantics = [#tpu.dimension_semantics<core_parallel>], iteration_bounds = array<i64: 2>, tpu.core_type = #tpu.core_type<sc_scalar_subcore>, window_params = []} {
    return
  }
}

module attributes {stable_mosaic.version = 11 : i64} {
  func.func @_vfe_stage1_kernel(%arg0: i32, %arg1: memref<4x512xf32, #tpu.memory_space<vmem>>, %arg2: memref<3x512xf32, #tpu.memory_space<vmem>>, %arg3: memref<3x512xf32, #tpu.memory_space<vmem>>, %arg4: memref<32x3xbf16, #tpu.memory_space<vmem>>, %arg5: memref<32x1xf32, #tpu.memory_space<vmem>>, %arg6: memref<32x32xbf16, #tpu.memory_space<vmem>>, %arg7: memref<32x1xf32, #tpu.memory_space<vmem>>, %arg8: memref<32x4xbf16, #tpu.memory_space<vmem>>, %arg9: memref<32x32xbf16, #tpu.memory_space<vmem>>, %arg10: memref<32x3xbf16, #tpu.memory_space<vmem>>, %arg11: memref<32x1xf32, #tpu.memory_space<vmem>>, %arg12: memref<32x512xbf16, #tpu.memory_space<vmem>>) attributes {dimension_semantics = [#tpu.dimension_semantics<parallel>], iteration_bounds = array<i64: 1>, scalar_prefetch = 0 : i64, scratch_operands = 0 : i64, tpu.core_type = #tpu.core_type<tc>, window_params = [{transform_indices = @transform_0, window_bounds = array<i64: 4, 512>}, {transform_indices = @transform_1, window_bounds = array<i64: 3, 512>}, {transform_indices = @transform_2, window_bounds = array<i64: 3, 512>}, {pipeline_mode = #tpu.pipeline_mode<synchronous>, transform_indices = @transform_3, window_bounds = array<i64: 32, 3>}, {pipeline_mode = #tpu.pipeline_mode<synchronous>, transform_indices = @transform_4, window_bounds = array<i64: 32, 1>}, {pipeline_mode = #tpu.pipeline_mode<synchronous>, transform_indices = @transform_5, window_bounds = array<i64: 32, 32>}, {pipeline_mode = #tpu.pipeline_mode<synchronous>, transform_indices = @transform_6, window_bounds = array<i64: 32, 1>}, {pipeline_mode = #tpu.pipeline_mode<synchronous>, transform_indices = @transform_7, window_bounds = array<i64: 32, 4>}, {pipeline_mode = #tpu.pipeline_mode<synchronous>, transform_indices = @transform_8, window_bounds = array<i64: 32, 32>}, {pipeline_mode = #tpu.pipeline_mode<synchronous>, transform_indices = @transform_9, window_bounds = array<i64: 32, 3>}, {pipeline_mode = #tpu.pipeline_mode<synchronous>, transform_indices = @transform_10, window_bounds = array<i64: 32, 1>}, {transform_indices = @transform_11, window_bounds = array<i64: 32, 512>}]} {
    %c0 = arith.constant 0 : index
    %c0_0 = arith.constant 0 : index
    %0 = vector.load %arg1[%c0, %c0_0] : memref<4x512xf32, #tpu.memory_space<vmem>>, vector<4x512xf32>
    %1 = vector.extract_strided_slice %0 {offsets = [0, 0], sizes = [3, 512], strides = [1, 1]} : vector<4x512xf32> to vector<3x512xf32>
    %c0_1 = arith.constant 0 : index
    %c0_2 = arith.constant 0 : index
    %2 = vector.load %arg2[%c0_1, %c0_2] : memref<3x512xf32, #tpu.memory_space<vmem>>, vector<3x512xf32>
    %3 = arith.subf %1, %2 : vector<3x512xf32>
    %4 = arith.truncf %3 : vector<3x512xf32> to vector<3x512xbf16>
    %c0_3 = arith.constant 0 : index
    %c0_4 = arith.constant 0 : index
    %5 = vector.load %arg3[%c0_3, %c0_4] : memref<3x512xf32, #tpu.memory_space<vmem>>, vector<3x512xf32>
    %6 = arith.subf %1, %5 : vector<3x512xf32>
    %7 = arith.truncf %6 : vector<3x512xf32> to vector<3x512xbf16>
    %c0_5 = arith.constant 0 : index
    %c0_6 = arith.constant 0 : index
    %8 = vector.load %arg4[%c0_5, %c0_6] : memref<32x3xbf16, #tpu.memory_space<vmem>>, vector<32x3xbf16>
    %cst = arith.constant dense<0.000000e+00> : vector<32x512xf32>
    %9 = tpu.matmul %8, %4, %cst {dimension_numbers = #tpu.dot_dimension_numbers<[1], [0], [0], [1], [0, 0, 1, 1], [], []>} : vector<32x3xbf16>, vector<3x512xbf16>, vector<32x512xf32> -> vector<32x512xf32>
    %c0_7 = arith.constant 0 : index
    %c0_8 = arith.constant 0 : index
    %10 = vector.load %arg5[%c0_7, %c0_8] : memref<32x1xf32, #tpu.memory_space<vmem>>, vector<32x1xf32>
    %11 = vector.broadcast %10 : vector<32x1xf32> to vector<32x512xf32>
    %12 = arith.addf %9, %11 : vector<32x512xf32>
    %13 = math.tanh %12 : vector<32x512xf32>
    %c0_9 = arith.constant 0 : index
    %c0_10 = arith.constant 0 : index
    %14 = vector.load %arg6[%c0_9, %c0_10] : memref<32x32xbf16, #tpu.memory_space<vmem>>, vector<32x32xbf16>
    %15 = arith.truncf %13 : vector<32x512xf32> to vector<32x512xbf16>
    %cst_11 = arith.constant dense<0.000000e+00> : vector<32x512xf32>
    %16 = tpu.matmul %14, %15, %cst_11 {dimension_numbers = #tpu.dot_dimension_numbers<[1], [0], [0], [1], [0, 0, 1, 1], [], []>} : vector<32x32xbf16>, vector<32x512xbf16>, vector<32x512xf32> -> vector<32x512xf32>
    %c0_12 = arith.constant 0 : index
    %c0_13 = arith.constant 0 : index
    %17 = vector.load %arg7[%c0_12, %c0_13] : memref<32x1xf32, #tpu.memory_space<vmem>>, vector<32x1xf32>
    %18 = vector.broadcast %17 : vector<32x1xf32> to vector<32x512xf32>
    %19 = arith.addf %16, %18 : vector<32x512xf32>
    %20 = math.tanh %19 : vector<32x512xf32>
    %c0_14 = arith.constant 0 : index
    %c0_15 = arith.constant 0 : index
    %21 = vector.load %arg8[%c0_14, %c0_15] : memref<32x4xbf16, #tpu.memory_space<vmem>>, vector<32x4xbf16>
    %22 = arith.truncf %0 : vector<4x512xf32> to vector<4x512xbf16>
    %cst_16 = arith.constant dense<0.000000e+00> : vector<32x512xf32>
    %23 = tpu.matmul %21, %22, %cst_16 {dimension_numbers = #tpu.dot_dimension_numbers<[1], [0], [0], [1], [0, 0, 1, 1], [], []>} : vector<32x4xbf16>, vector<4x512xbf16>, vector<32x512xf32> -> vector<32x512xf32>
    %c0_17 = arith.constant 0 : index
    %c0_18 = arith.constant 0 : index
    %24 = vector.load %arg9[%c0_17, %c0_18] : memref<32x32xbf16, #tpu.memory_space<vmem>>, vector<32x32xbf16>
    %25 = arith.truncf %20 : vector<32x512xf32> to vector<32x512xbf16>
    %cst_19 = arith.constant dense<0.000000e+00> : vector<32x512xf32>
    %26 = tpu.matmul %24, %25, %cst_19 {dimension_numbers = #tpu.dot_dimension_numbers<[1], [0], [0], [1], [0, 0, 1, 1], [], []>} : vector<32x32xbf16>, vector<32x512xbf16>, vector<32x512xf32> -> vector<32x512xf32>
    %27 = arith.addf %23, %26 : vector<32x512xf32>
    %c0_20 = arith.constant 0 : index
    %c0_21 = arith.constant 0 : index
    %28 = vector.load %arg10[%c0_20, %c0_21] : memref<32x3xbf16, #tpu.memory_space<vmem>>, vector<32x3xbf16>
    %cst_22 = arith.constant dense<0.000000e+00> : vector<32x512xf32>
    %29 = tpu.matmul %28, %7, %cst_22 {dimension_numbers = #tpu.dot_dimension_numbers<[1], [0], [0], [1], [0, 0, 1, 1], [], []>} : vector<32x3xbf16>, vector<3x512xbf16>, vector<32x512xf32> -> vector<32x512xf32>
    %30 = arith.addf %27, %29 : vector<32x512xf32>
    %c0_23 = arith.constant 0 : index
    %c0_24 = arith.constant 0 : index
    %31 = vector.load %arg11[%c0_23, %c0_24] : memref<32x1xf32, #tpu.memory_space<vmem>>, vector<32x1xf32>
    %32 = vector.broadcast %31 : vector<32x1xf32> to vector<32x512xf32>
    %33 = arith.addf %30, %32 : vector<32x512xf32>
    %cst_25 = arith.constant 0.000000e+00 : f32
    %34 = vector.broadcast %cst_25 : f32 to vector<32x512xf32>
    %35 = arith.maximumf %33, %34 : vector<32x512xf32>
    %36 = arith.truncf %35 : vector<32x512xf32> to vector<32x512xbf16>
    %c0_26 = arith.constant 0 : index
    %c0_27 = arith.constant 0 : index
    %37 = vector.load %arg12[%c0_26, %c0_27] : memref<32x512xbf16, #tpu.memory_space<vmem>>, vector<32x512xbf16>
    tpu.vector_store %arg12[%c0_26, %c0_27], %36 {strides = array<i32>} : memref<32x512xbf16, #tpu.memory_space<vmem>>, vector<32x512xbf16>,
    return
  }
  func.func @transform_0(%arg0: i32) -> (i32, i32) {
    %c0_i32 = arith.constant 0 : i32
    %c0_i32_0 = arith.constant 0 : i32
    return %c0_i32, %arg0 : i32, i32
  }
  func.func @transform_1(%arg0: i32) -> (i32, i32) {
    %c0_i32 = arith.constant 0 : i32
    %c0_i32_0 = arith.constant 0 : i32
    return %c0_i32, %arg0 : i32, i32
  }
  func.func @transform_2(%arg0: i32) -> (i32, i32) {
    %c0_i32 = arith.constant 0 : i32
    %c0_i32_0 = arith.constant 0 : i32
    return %c0_i32, %arg0 : i32, i32
  }
  func.func @transform_3(%arg0: i32) -> (i32, i32) {
    %c0_i32 = arith.constant 0 : i32
    %c0_i32_0 = arith.constant 0 : i32
    %c0_i32_1 = arith.constant 0 : i32
    return %c0_i32, %c0_i32_0 : i32, i32
  }
  func.func @transform_4(%arg0: i32) -> (i32, i32) {
    %c0_i32 = arith.constant 0 : i32
    %c0_i32_0 = arith.constant 0 : i32
    %c0_i32_1 = arith.constant 0 : i32
    return %c0_i32, %c0_i32_0 : i32, i32
  }
  func.func @transform_5(%arg0: i32) -> (i32, i32) {
    %c0_i32 = arith.constant 0 : i32
    %c0_i32_0 = arith.constant 0 : i32
    %c0_i32_1 = arith.constant 0 : i32
    return %c0_i32, %c0_i32_0 : i32, i32
  }
  func.func @transform_6(%arg0: i32) -> (i32, i32) {
    %c0_i32 = arith.constant 0 : i32
    %c0_i32_0 = arith.constant 0 : i32
    %c0_i32_1 = arith.constant 0 : i32
    return %c0_i32, %c0_i32_0 : i32, i32
  }
  func.func @transform_7(%arg0: i32) -> (i32, i32) {
    %c0_i32 = arith.constant 0 : i32
    %c0_i32_0 = arith.constant 0 : i32
    %c0_i32_1 = arith.constant 0 : i32
    return %c0_i32, %c0_i32_0 : i32, i32
  }
  func.func @transform_8(%arg0: i32) -> (i32, i32) {
    %c0_i32 = arith.constant 0 : i32
    %c0_i32_0 = arith.constant 0 : i32
    %c0_i32_1 = arith.constant 0 : i32
    return %c0_i32, %c0_i32_0 : i32, i32
  }
  func.func @transform_9(%arg0: i32) -> (i32, i32) {
    %c0_i32 = arith.constant 0 : i32
    %c0_i32_0 = arith.constant 0 : i32
    %c0_i32_1 = arith.constant 0 : i32
    return %c0_i32, %c0_i32_0 : i32, i32
  }
  func.func @transform_10(%arg0: i32) -> (i32, i32) {
    %c0_i32 = arith.constant 0 : i32
    %c0_i32_0 = arith.constant 0 : i32
    %c0_i32_1 = arith.constant 0 : i32
    return %c0_i32, %c0_i32_0 : i32, i32
  }
  func.func @transform_11(%arg0: i32) -> (i32, i32) {
    %c0_i32 = arith.constant 0 : i32
    %c0_i32_0 = arith.constant 0 : i32
    return %c0_i32, %arg0 : i32, i32
  }
}

module attributes {stable_mosaic.version = 11 : i64} {
  func.func @_vfe_stage2_kernel(%arg0: i32, %arg1: memref<32x512xbf16, #tpu.memory_space<vmem>>, %arg2: memref<32x512xbf16, #tpu.memory_space<vmem>>, %arg3: memref<32x32xbf16, #tpu.memory_space<vmem>>, %arg4: memref<32x32xbf16, #tpu.memory_space<vmem>>, %arg5: memref<32x1xf32, #tpu.memory_space<vmem>>, %arg6: memref<32x512xbf16, #tpu.memory_space<vmem>>) attributes {dimension_semantics = [#tpu.dimension_semantics<parallel>], iteration_bounds = array<i64: 1>, scalar_prefetch = 0 : i64, scratch_operands = 0 : i64, tpu.core_type = #tpu.core_type<tc>, window_params = [{transform_indices = @transform_0, window_bounds = array<i64: 32, 512>}, {transform_indices = @transform_1, window_bounds = array<i64: 32, 512>}, {pipeline_mode = #tpu.pipeline_mode<synchronous>, transform_indices = @transform_2, window_bounds = array<i64: 32, 32>}, {pipeline_mode = #tpu.pipeline_mode<synchronous>, transform_indices = @transform_3, window_bounds = array<i64: 32, 32>}, {pipeline_mode = #tpu.pipeline_mode<synchronous>, transform_indices = @transform_4, window_bounds = array<i64: 32, 1>}, {transform_indices = @transform_5, window_bounds = array<i64: 32, 512>}]} {
    %c0 = arith.constant 0 : index
    %c0_0 = arith.constant 0 : index
    %0 = vector.load %arg3[%c0, %c0_0] : memref<32x32xbf16, #tpu.memory_space<vmem>>, vector<32x32xbf16>
    %c0_1 = arith.constant 0 : index
    %c0_2 = arith.constant 0 : index
    %1 = vector.load %arg1[%c0_1, %c0_2] : memref<32x512xbf16, #tpu.memory_space<vmem>>, vector<32x512xbf16>
    %cst = arith.constant dense<0.000000e+00> : vector<32x512xf32>
    %2 = tpu.matmul %0, %1, %cst {dimension_numbers = #tpu.dot_dimension_numbers<[1], [0], [0], [1], [0, 0, 1, 1], [], []>} : vector<32x32xbf16>, vector<32x512xbf16>, vector<32x512xf32> -> vector<32x512xf32>
    %c0_3 = arith.constant 0 : index
    %c0_4 = arith.constant 0 : index
    %3 = vector.load %arg4[%c0_3, %c0_4] : memref<32x32xbf16, #tpu.memory_space<vmem>>, vector<32x32xbf16>
    %c0_5 = arith.constant 0 : index
    %c0_6 = arith.constant 0 : index
    %4 = vector.load %arg2[%c0_5, %c0_6] : memref<32x512xbf16, #tpu.memory_space<vmem>>, vector<32x512xbf16>
    %cst_7 = arith.constant dense<0.000000e+00> : vector<32x512xf32>
    %5 = tpu.matmul %3, %4, %cst_7 {dimension_numbers = #tpu.dot_dimension_numbers<[1], [0], [0], [1], [0, 0, 1, 1], [], []>} : vector<32x32xbf16>, vector<32x512xbf16>, vector<32x512xf32> -> vector<32x512xf32>
    %6 = arith.addf %2, %5 : vector<32x512xf32>
    %c0_8 = arith.constant 0 : index
    %c0_9 = arith.constant 0 : index
    %7 = vector.load %arg5[%c0_8, %c0_9] : memref<32x1xf32, #tpu.memory_space<vmem>>, vector<32x1xf32>
    %8 = vector.broadcast %7 : vector<32x1xf32> to vector<32x512xf32>
    %9 = arith.addf %6, %8 : vector<32x512xf32>
    %cst_10 = arith.constant 0.000000e+00 : f32
    %10 = vector.broadcast %cst_10 : f32 to vector<32x512xf32>
    %11 = arith.maximumf %9, %10 : vector<32x512xf32>
    %12 = arith.truncf %11 : vector<32x512xf32> to vector<32x512xbf16>
    %c0_11 = arith.constant 0 : index
    %c0_12 = arith.constant 0 : index
    %13 = vector.load %arg6[%c0_11, %c0_12] : memref<32x512xbf16, #tpu.memory_space<vmem>>, vector<32x512xbf16>
    tpu.vector_store %arg6[%c0_11, %c0_12], %12 {strides = array<i32>} : memref<32x512xbf16, #tpu.memory_space<vmem>>, vector<32x512xbf16>,
    return
  }
  func.func @transform_0(%arg0: i32) -> (i32, i32) {
    %c0_i32 = arith.constant 0 : i32
    %c0_i32_0 = arith.constant 0 : i32
    return %c0_i32, %arg0 : i32, i32
  }
  func.func @transform_1(%arg0: i32) -> (i32, i32) {
    %c0_i32 = arith.constant 0 : i32
    %c0_i32_0 = arith.constant 0 : i32
    return %c0_i32, %arg0 : i32, i32
  }
  func.func @transform_2(%arg0: i32) -> (i32, i32) {
    %c0_i32 = arith.constant 0 : i32
    %c0_i32_0 = arith.constant 0 : i32
    %c0_i32_1 = arith.constant 0 : i32
    return %c0_i32, %c0_i32_0 : i32, i32
  }
  func.func @transform_3(%arg0: i32) -> (i32, i32) {
    %c0_i32 = arith.constant 0 : i32
    %c0_i32_0 = arith.constant 0 : i32
    %c0_i32_1 = arith.constant 0 : i32
    return %c0_i32, %c0_i32_0 : i32, i32
  }
  func.func @transform_4(%arg0: i32) -> (i32, i32) {
    %c0_i32 = arith.constant 0 : i32
    %c0_i32_0 = arith.constant 0 : i32
    %c0_i32_1 = arith.constant 0 : i32
    return %c0_i32, %c0_i32_0 : i32, i32
  }
  func.func @transform_5(%arg0: i32) -> (i32, i32) {
    %c0_i32 = arith.constant 0 : i32
    %c0_i32_0 = arith.constant 0 : i32
    return %c0_i32, %arg0 : i32, i32
  }
}

</mosaic_0001>

<llo_original>
// kernel: _forward_core.2
$region0: #{_forward_core.2}
  #allocation0 [shape = 'u32[]', space=smem, size = 0x4, offset = 0x4, fixed_abs, tag = 'smem constant byte address 0x4 - core index']
  #allocation1 [shape = 'u32[144,128]{1,0:T(1,128)}', space=vmem, size = 0x12000, scoped, tag = 'internal scratch']
  %s0 = inlined_call_operand.vmem [shape: f32[4,512], index: 0, kind: input, shape index: {}]
  %s1 = inlined_call_operand.vmem [shape: f32[3,512], index: 1, kind: input, shape index: {}]
  %s2 = inlined_call_operand.vmem [shape: f32[3,512], index: 2, kind: input, shape index: {}]
  %s3 = inlined_call_operand.vmem [shape: bf16[32,3], index: 3, kind: input, shape index: {}]
  %s4 = inlined_call_operand.vmem [shape: f32[32,1], index: 4, kind: input, shape index: {}]
  %s5 = inlined_call_operand.vmem [shape: bf16[32,32], index: 5, kind: input, shape index: {}]
  %s6 = inlined_call_operand.vmem [shape: f32[32,1], index: 6, kind: input, shape index: {}]
  %s7 = inlined_call_operand.vmem [shape: bf16[32,4], index: 7, kind: input, shape index: {}]
  %s8 = inlined_call_operand.vmem [shape: bf16[32,32], index: 8, kind: input, shape index: {}]
  %s9 = inlined_call_operand.vmem [shape: bf16[32,3], index: 9, kind: input, shape index: {}]
  %s10 = inlined_call_operand.vmem [shape: f32[32,1], index: 10, kind: input, shape index: {}]
  %s11 = inlined_call_operand.vmem [shape: bf16[32,512], index: 11, kind: output, shape index: {}]
  %s12 = sld [smem:[#allocation0]]
  $region54: #{_forward_core.2} parent=0
    _
  %s14 = ssub.s32 1, %s12
  %s15 = scalar_select 0, %s14, %s12
  // Predicated region
  $region2: #{_forward_core.2} parent=0 // pred_check
    _
  $region3: #{_forward_core.2} parent=0 // pred_check_branch
    %17 = sbr.rel (0) target = $region5
  $region4: #{_forward_core.2} parent=0 // pred_region
    _
  $region5: #{_forward_core.2} parent=0 // pred_fallthru
    _
  // Predicated region
  $region6: #{_forward_core.2} parent=0 // pred_check
    _
  $region7: #{_forward_core.2} parent=0 // pred_check_branch
    %19 = sbr.rel (0) target = $region9
  $region8: #{_forward_core.2} parent=0 // pred_region
    _
  $region9: #{_forward_core.2} parent=0 // pred_fallthru
    _
  // Predicated region
  $region10: #{_forward_core.2} parent=0 // pred_check
    _
  $region11: #{_forward_core.2} parent=0 // pred_check_branch
    %21 = sbr.rel (0) target = $region13
  $region12: #{_forward_core.2} parent=0 // pred_region
    _
  $region13: #{_forward_core.2} parent=0 // pred_fallthru
    _
  // Predicated region
  $region14: #{_forward_core.2} parent=0 // pred_check
    _
  $region15: #{_forward_core.2} parent=0 // pred_check_branch
    %23 = sbr.rel (0) target = $region17
  $region16: #{_forward_core.2} parent=0 // pred_region
    _
  $region17: #{_forward_core.2} parent=0 // pred_fallthru
    _
  // Predicated region
  $region18: #{_forward_core.2} parent=0 // pred_check
    _
  $region19: #{_forward_core.2} parent=0 // pred_check_branch
    %25 = sbr.rel (0) target = $region21
  $region20: #{_forward_core.2} parent=0 // pred_region
    _
  $region21: #{_forward_core.2} parent=0 // pred_fallthru
    _
  // Predicated region
  $region22: #{_forward_core.2} parent=0 // pred_check
    _
  $region23: #{_forward_core.2} parent=0 // pred_check_branch
    %27 = sbr.rel (0) target = $region25
  $region24: #{_forward_core.2} parent=0 // pred_region
    _
  $region25: #{_forward_core.2} parent=0 // pred_fallthru
    _
  // Predicated region
  $region26: #{_forward_core.2} parent=0 // pred_check
    _
  $region27: #{_forward_core.2} parent=0 // pred_check_branch
    %29 = sbr.rel (0) target = $region29
  $region28: #{_forward_core.2} parent=0 // pred_region
    _
  $region29: #{_forward_core.2} parent=0 // pred_fallthru
    _
  // Predicated region
  $region30: #{_forward_core.2} parent=0 // pred_check
    _
  $region31: #{_forward_core.2} parent=0 // pred_check_branch
    %31 = sbr.rel (0) target = $region33
  $region32: #{_forward_core.2} parent=0 // pred_region
    _
  $region33: #{_forward_core.2} parent=0 // pred_fallthru
    _
  // Predicated region
  $region34: #{_forward_core.2} parent=0 // pred_check
    _
  $region35: #{_forward_core.2} parent=0 // pred_check_branch
    %33 = sbr.rel (0) target = $region37
  $region36: #{_forward_core.2} parent=0 // pred_region
    _
  $region37: #{_forward_core.2} parent=0 // pred_fallthru
    _
  // Predicated region
  $region38: #{_forward_core.2} parent=0 // pred_check
    _
  $region39: #{_forward_core.2} parent=0 // pred_check_branch
    %35 = sbr.rel (0) target = $region41
  $region40: #{_forward_core.2} parent=0 // pred_region
    _
  $region41: #{_forward_core.2} parent=0 // pred_fallthru
    _
  // Predicated region
  $region42: #{_forward_core.2} parent=0 // pred_check
    _
  $region43: #{_forward_core.2} parent=0 // pred_check_branch
    %37 = sbr.rel (0) target = $region45
  $region44: #{_forward_core.2} parent=0 // pred_region
    _
  $region45: #{_forward_core.2} parent=0 // pred_fallthru
    _
  %v39 = vld [vmem:[%s0] sm:$0xff]
  %v40 = vld [vmem:[%s0 + $0x8] sm:$0xff]
  %v41 = vld [vmem:[%s1] sm:$0x77]
  %v42 = vld [vmem:[%s1 + $0x8] sm:$0x77]
  %v43 = vsub.f32 %v39, %v41
  %v44 = vsub.f32 %v40, %v42
  %v47 = vcombine.high %v43, %v43
  %v48 = vcombine.high %v44, %v44
  %v51 = vpack.c.bf16 %v43, %v43
  %v52 = vpack.c.bf16 %v47, %v47
  %v53 = vpack.c.bf16 %v44, %v44
  %v54 = vpack.c.bf16 %v48, %v48
  %v55 = vld [vmem:[%s2] sm:$0x77]
  %v56 = vld [vmem:[%s2 + $0x8] sm:$0x77]
  %v57 = vsub.f32 %v39, %v55
  %v58 = vsub.f32 %v40, %v56
  %v61 = vcombine.high %v57, %v57
  %v62 = vcombine.high %v58, %v58
  %v65 = vpack.c.bf16 %v57, %v57
  %v66 = vpack.c.bf16 %v61, %v61
  %v67 = vpack.c.bf16 %v58, %v58
  %v68 = vpack.c.bf16 %v62, %v62
  %v69 = vld [vmem:[%s3] sm:$0xf]
  %v70 = vld [vmem:[%s3 + $0x4] sm:$0xf]
  %v71 = vld [vmem:[%s3 + $0x8] sm:$0xf]
  %v72 = vld [vmem:[%s3 + $0xc] sm:$0xf]
  %v73 = vld [vmem:[%s4] sm:$0xff]
  %v74 = vld [vmem:[%s4 + $0x8] sm:$0xff]
  %v75 = vld [vmem:[%s4 + $0x10] sm:$0xff]
  %v76 = vld [vmem:[%s4 + $0x18] sm:$0xff]
  %78 = vset.pattern.permute.xlu0 0
  %79 = vperm.xlu0 %78, %v73
  %v80 = vpop.permute.xlu0 %79
  %83 = vset.pattern.permute.xlu0 0
  %84 = vperm.xlu0 %83, %v74
  %v85 = vpop.permute.xlu0 %84
  %88 = vset.pattern.permute.xlu0 0
  %89 = vperm.xlu0 %88, %v75
  %v90 = vpop.permute.xlu0 %89
  %93 = vset.pattern.permute.xlu0 0
  %94 = vperm.xlu0 %93, %v76
  %v95 = vpop.permute.xlu0 %94
  %v101 = vunpack.c.l.b16 %v69
  %v102 = vunpack.c.l.b16 %v70
  %v103 = vunpack.c.l.b16 %v71
  %v104 = vunpack.c.l.b16 %v72
  %v105 = vpack.c.b16 %v102, %v101
  %v106 = vpack.c.b16 %v104, %v103
  %vm107 = vcmask 23552
  %v109 = vsel %vm107, %v105, 0
  %v112 = vsel %vm107, %v106, 0
  %vm114 = vcmask 1040384
  %vm115 = vcmask 1041408
  %v116 = vsel %vm114, 4294967295, 65535
  %v117 = vsel %vm115, %v116, 0
  %v119 = vand.u32 %v51, %v117
  %v122 = vand.u32 %v52, %v117
  %v125 = vand.u32 %v53, %v117
  %v128 = vand.u32 %v54, %v117
  %130 = vmatprep.subr.bf16.mxu0 %v122
  %131 = vmatpush1.bf16.msra.mxu0 %v119
  %132 = vmatprep.subr.bf16.mxu0 0
  %133 = vmatpush1.bf16.msra.mxu0 0
  %134 = vmatprep.subr.bf16.mxu0 0
  %135 = vmatpush1.bf16.msra.mxu0 0
  %136 = vmatprep.subr.bf16.mxu0 0
  %137 = vmatpush1.bf16.msra.mxu0 0
  %138 = vmatprep.subr.bf16.mxu0 0
  %139 = vmatpush1.bf16.msra.mxu0 0
  %140 = vmatprep.subr.bf16.mxu0 0
  %141 = vmatpush1.bf16.msra.mxu0 0
  %142 = vmatprep.subr.bf16.mxu0 0
  %143 = vmatpush1.bf16.msra.mxu0 0
  %144 = vmatprep.subr.bf16.mxu0 0
  %145 = vmatpush1.bf16.msra.mxu0 0
  %146 = vmatprep.subr.bf16.mxu0 0
  %147 = vmatpush1.bf16.msra.mxu0 0
  %148 = vmatprep.subr.bf16.mxu0 0
  %149 = vmatpush1.bf16.msra.mxu0 0
  %150 = vmatprep.subr.bf16.mxu0 0
  %151 = vmatpush1.bf16.msra.mxu0 0
  %152 = vmatprep.subr.bf16.mxu0 0
  %153 = vmatpush1.bf16.msra.mxu0 0
  %154 = vmatprep.subr.bf16.mxu0 0
  %155 = vmatpush1.bf16.msra.mxu0 0
  %156 = vmatprep.subr.bf16.mxu0 0
  %157 = vmatpush1.bf16.msra.mxu0 0
  %158 = vmatprep.subr.bf16.mxu0 0
  %159 = vmatpush1.bf16.msra.mxu0 0
  %160 = vmatprep.subr.bf16.mxu0 0
  %161 = vmatpush1.bf16.msra.mxu0 0
  %162 = vmatprep.mubr.bf16.mxu0 0
  %163 = vmatmul.mubr.bf16.gmra.mrb[0].mxu0 %v109
  %v164 = vpop.f32.mrb[0].mxu0
  %v165 = vadd.f32 %v80, %v164
  %v166 = vpop.f32.mrb[0].mxu0
  %v167 = vadd.f32 %v80, %v166
  %v168 = vpop.f32.mrb[0].mxu0
  %v169 = vadd.f32 %v85, %v168
  %v170 = vpop.f32.mrb[0].mxu0
  %v171 = vadd.f32 %v85, %v170
  %172 = vmatprep.mubr.bf16.mxu0 0
  %173 = vmatmul.mubr.bf16.gmra.mrb[0].mxu0 %v112
  %v174 = vpop.f32.mrb[0].mxu0
  %v175 = vadd.f32 %v90, %v174
  %v176 = vpop.f32.mrb[0].mxu0
  %v177 = vadd.f32 %v90, %v176
  %v178 = vpop.f32.mrb[0].mxu0
  %v179 = vadd.f32 %v95, %v178
  %v180 = vpop.f32.mrb[0].mxu0
  %v181 = vadd.f32 %v95, %v180
  %182 = vdwg.mxu0
  %183 = vmatprep.subr.bf16.mxu0 %v128
  %184 = vmatpush1.bf16.msra.mxu0 %v125
  %185 = vmatprep.subr.bf16.mxu0 0
  %186 = vmatpush1.bf16.msra.mxu0 0
  %187 = vmatprep.subr.bf16.mxu0 0
  %188 = vmatpush1.bf16.msra.mxu0 0
  %189 = vmatprep.subr.bf16.mxu0 0
  %190 = vmatpush1.bf16.msra.mxu0 0
  %191 = vmatprep.subr.bf16.mxu0 0
  %192 = vmatpush1.bf16.msra.mxu0 0
  %193 = vmatprep.subr.bf16.mxu0 0
  %194 = vmatpush1.bf16.msra.mxu0 0
  %195 = vmatprep.subr.bf16.mxu0 0
  %196 = vmatpush1.bf16.msra.mxu0 0
  %197 = vmatprep.subr.bf16.mxu0 0
  %198 = vmatpush1.bf16.msra.mxu0 0
  %199 = vmatprep.subr.bf16.mxu0 0
  %200 = vmatpush1.bf16.msra.mxu0 0
  %201 = vmatprep.subr.bf16.mxu0 0
  %202 = vmatpush1.bf16.msra.mxu0 0
  %203 = vmatprep.subr.bf16.mxu0 0
  %204 = vmatpush1.bf16.msra.mxu0 0
  %205 = vmatprep.subr.bf16.mxu0 0
  %206 = vmatpush1.bf16.msra.mxu0 0
  %207 = vmatprep.subr.bf16.mxu0 0
  %208 = vmatpush1.bf16.msra.mxu0 0
  %209 = vmatprep.subr.bf16.mxu0 0
  %210 = vmatpush1.bf16.msra.mxu0 0
  %211 = vmatprep.subr.bf16.mxu0 0
  %212 = vmatpush1.bf16.msra.mxu0 0
  %213 = vmatprep.subr.bf16.mxu0 0
  %214 = vmatpush1.bf16.msra.mxu0 0
  %215 = vmatprep.mubr.bf16.mxu0 0
  %216 = vmatmul.mubr.bf16.gmra.mrb[0].mxu0 %v109
  %v217 = vpop.f32.mrb[0].mxu0
  %v218 = vadd.f32 %v80, %v217
  %v219 = vpop.f32.mrb[0].mxu0
  %v220 = vadd.f32 %v80, %v219
  %v221 = vpop.f32.mrb[0].mxu0
  %v222 = vadd.f32 %v85, %v221
  %v223 = vpop.f32.mrb[0].mxu0
  %v224 = vadd.f32 %v85, %v223
  %225 = vmatprep.mubr.bf16.mxu0 0
  %226 = vmatmul.mubr.bf16.gmra.mrb[0].mxu0 %v112
  %v227 = vpop.f32.mrb[0].mxu0
  %v228 = vadd.f32 %v90, %v227
  %v229 = vpop.f32.mrb[0].mxu0
  %v230 = vadd.f32 %v90, %v229
  %v231 = vpop.f32.mrb[0].mxu0
  %v232 = vadd.f32 %v95, %v231
  %v233 = vpop.f32.mrb[0].mxu0
  %v234 = vadd.f32 %v95, %v233
  %235 = vdwg.mxu0
  %v236 = vtanh.pop %v165
  %v237 = vtanh.pop %v167
  %v238 = vtanh.pop %v218
  %v239 = vtanh.pop %v220
  %v240 = vtanh.pop %v169
  %v241 = vtanh.pop %v171
  %v242 = vtanh.pop %v222
  %v243 = vtanh.pop %v224
  %v244 = vtanh.pop %v175
  %v245 = vtanh.pop %v177
  %v246 = vtanh.pop %v228
  %v247 = vtanh.pop %v230
  %v248 = vtanh.pop %v179
  %v249 = vtanh.pop %v181
  %v250 = vtanh.pop %v232
  %v251 = vtanh.pop %v234
  %v252 = vld [vmem:[%s5] sm:$0xf]
  %v253 = vld [vmem:[%s5 + $0x4] sm:$0xf]
  %v254 = vld [vmem:[%s5 + $0x8] sm:$0xf]
  %v255 = vld [vmem:[%s5 + $0xc] sm:$0xf]
  %v256 = vpack.c.bf16 %v240, %v236
  %v257 = vpack.c.bf16 %v241, %v237
  %v258 = vpack.c.bf16 %v242, %v238
  %v259 = vpack.c.bf16 %v243, %v239
  %v260 = vpack.c.bf16 %v248, %v244
  %v261 = vpack.c.bf16 %v249, %v245
  %v262 = vpack.c.bf16 %v250, %v246
  %v263 = vpack.c.bf16 %v251, %v247
  %v264 = vld [vmem:[%s6] sm:$0xff]
  %v265 = vld [vmem:[%s6 + $0x8] sm:$0xff]
  %v266 = vld [vmem:[%s6 + $0x10] sm:$0xff]
  %v267 = vld [vmem:[%s6 + $0x18] sm:$0xff]
  %269 = vset.pattern.permute.xlu0 0
  %270 = vperm.xlu0 %269, %v264
  %v271 = vpop.permute.xlu0 %270
  %274 = vset.pattern.permute.xlu0 0
  %275 = vperm.xlu0 %274, %v265
  %v276 = vpop.permute.xlu0 %275
  %279 = vset.pattern.permute.xlu0 0
  %280 = vperm.xlu0 %279, %v266
  %v281 = vpop.permute.xlu0 %280
  %284 = vset.pattern.permute.xlu0 0
  %285 = vperm.xlu0 %284, %v267
  %v286 = vpop.permute.xlu0 %285
  %v292 = vunpack.c.l.b16 %v252
  %v293 = vunpack.c.l.b16 %v253
  %v294 = vunpack.c.l.b16 %v254
  %v295 = vunpack.c.l.b16 %v255
  %v296 = vpack.c.b16 %v293, %v292
  %v297 = vpack.c.b16 %v295, %v294
  %vm298 = vcmask 261120
  %v300 = vsel %vm298, %v296, 0
  %v303 = vsel %vm298, %v297, 0
  %305 = vmatprep.subr.bf16.mxu0 %v257
  %306 = vmatpush1.bf16.msra.mxu0 %v256
  %307 = vmatprep.subr.bf16.mxu0 %v261
  %308 = vmatpush1.bf16.msra.mxu0 %v260
  %309 = vmatprep.subr.bf16.mxu0 0
  %310 = vmatpush1.bf16.msra.mxu0 0
  %311 = vmatprep.subr.bf16.mxu0 0
  %312 = vmatpush1.bf16.msra.mxu0 0
  %313 = vmatprep.subr.bf16.mxu0 0
  %314 = vmatpush1.bf16.msra.mxu0 0
  %315 = vmatprep.subr.bf16.mxu0 0
  %316 = vmatpush1.bf16.msra.mxu0 0
  %317 = vmatprep.subr.bf16.mxu0 0
  %318 = vmatpush1.bf16.msra.mxu0 0
  %319 = vmatprep.subr.bf16.mxu0 0
  %320 = vmatpush1.bf16.msra.mxu0 0
  %321 = vmatprep.subr.bf16.mxu0 0
  %322 = vmatpush1.bf16.msra.mxu0 0
  %323 = vmatprep.subr.bf16.mxu0 0
  %324 = vmatpush1.bf16.msra.mxu0 0
  %325 = vmatprep.subr.bf16.mxu0 0
  %326 = vmatpush1.bf16.msra.mxu0 0
  %327 = vmatprep.subr.bf16.mxu0 0
  %328 = vmatpush1.bf16.msra.mxu0 0
  %329 = vmatprep.subr.bf16.mxu0 0
  %330 = vmatpush1.bf16.msra.mxu0 0
  %331 = vmatprep.subr.bf16.mxu0 0
  %332 = vmatpush1.bf16.msra.mxu0 0
  %333 = vmatprep.subr.bf16.mxu0 0
  %334 = vmatpush1.bf16.msra.mxu0 0
  %335 = vmatprep.subr.bf16.mxu0 0
  %336 = vmatpush1.bf16.msra.mxu0 0
  %337 = vmatprep.mubr.bf16.mxu0 0
  %338 = vmatmul.mubr.bf16.gmra.mrb[0].mxu0 %v300
  %v339 = vpop.f32.mrb[0].mxu0
  %v340 = vadd.f32 %v271, %v339
  %v341 = vpop.f32.mrb[0].mxu0
  %v342 = vadd.f32 %v271, %v341
  %v343 = vpop.f32.mrb[0].mxu0
  %v344 = vadd.f32 %v276, %v343
  %v345 = vpop.f32.mrb[0].mxu0
  %v346 = vadd.f32 %v276, %v345
  %347 = vmatprep.mubr.bf16.mxu0 0
  %348 = vmatmul.mubr.bf16.gmra.mrb[0].mxu0 %v303
  %v349 = vpop.f32.mrb[0].mxu0
  %v350 = vadd.f32 %v281, %v349
  %v351 = vpop.f32.mrb[0].mxu0
  %v352 = vadd.f32 %v281, %v351
  %v353 = vpop.f32.mrb[0].mxu0
  %v354 = vadd.f32 %v286, %v353
  %v355 = vpop.f32.mrb[0].mxu0
  %v356 = vadd.f32 %v286, %v355
  %357 = vdwg.mxu0
  %358 = vmatprep.subr.bf16.mxu0 %v259
  %359 = vmatpush1.bf16.msra.mxu0 %v258
  %360 = vmatprep.subr.bf16.mxu0 %v263
  %361 = vmatpush1.bf16.msra.mxu0 %v262
  %362 = vmatprep.subr.bf16.mxu0 0
  %363 = vmatpush1.bf16.msra.mxu0 0
  %364 = vmatprep.subr.bf16.mxu0 0
  %365 = vmatpush1.bf16.msra.mxu0 0
  %366 = vmatprep.subr.bf16.mxu0 0
  %367 = vmatpush1.bf16.msra.mxu0 0
  %368 = vmatprep.subr.bf16.mxu0 0
  %369 = vmatpush1.bf16.msra.mxu0 0
  %370 = vmatprep.subr.bf16.mxu0 0
  %371 = vmatpush1.bf16.msra.mxu0 0
  %372 = vmatprep.subr.bf16.mxu0 0
  %373 = vmatpush1.bf16.msra.mxu0 0
  %374 = vmatprep.subr.bf16.mxu0 0
  %375 = vmatpush1.bf16.msra.mxu0 0
  %376 = vmatprep.subr.bf16.mxu0 0
  %377 = vmatpush1.bf16.msra.mxu0 0
  %378 = vmatprep.subr.bf16.mxu0 0
  %379 = vmatpush1.bf16.msra.mxu0 0
  %380 = vmatprep.subr.bf16.mxu0 0
  %381 = vmatpush1.bf16.msra.mxu0 0
  %382 = vmatprep.subr.bf16.mxu0 0
  %383 = vmatpush1.bf16.msra.mxu0 0
  %384 = vmatprep.subr.bf16.mxu0 0
  %385 = vmatpush1.bf16.msra.mxu0 0
  %386 = vmatprep.subr.bf16.mxu0 0
  %387 = vmatpush1.bf16.msra.mxu0 0
  %388 = vmatprep.subr.bf16.mxu0 0
  %389 = vmatpush1.bf16.msra.mxu0 0
  %390 = vmatprep.mubr.bf16.mxu0 0
  %391 = vmatmul.mubr.bf16.gmra.mrb[0].mxu0 %v300
  %v392 = vpop.f32.mrb[0].mxu0
  %v393 = vadd.f32 %v271, %v392
  %v394 = vpop.f32.mrb[0].mxu0
  %v395 = vadd.f32 %v271, %v394
  %v396 = vpop.f32.mrb[0].mxu0
  %v397 = vadd.f32 %v276, %v396
  %v398 = vpop.f32.mrb[0].mxu0
  %v399 = vadd.f32 %v276, %v398
  %400 = vmatprep.mubr.bf16.mxu0 0
  %401 = vmatmul.mubr.bf16.gmra.mrb[0].mxu0 %v303
  %v402 = vpop.f32.mrb[0].mxu0
  %v403 = vadd.f32 %v281, %v402
  %v404 = vpop.f32.mrb[0].mxu0
  %v405 = vadd.f32 %v281, %v404
  %v406 = vpop.f32.mrb[0].mxu0
  %v407 = vadd.f32 %v286, %v406
  %v408 = vpop.f32.mrb[0].mxu0
  %v409 = vadd.f32 %v286, %v408
  %410 = vdwg.mxu0
  %v411 = vtanh.pop %v340
  %v412 = vtanh.pop %v342
  %v413 = vtanh.pop %v393
  %v414 = vtanh.pop %v395
  %v415 = vtanh.pop %v344
  %v416 = vtanh.pop %v346
  %v417 = vtanh.pop %v397
  %v418 = vtanh.pop %v399
  %v419 = vtanh.pop %v350
  %v420 = vtanh.pop %v352
  %v421 = vtanh.pop %v403
  %v422 = vtanh.pop %v405
  %v423 = vtanh.pop %v354
  %v424 = vtanh.pop %v356
  %v425 = vtanh.pop %v407
  %v426 = vtanh.pop %v409
  %v427 = vld [vmem:[%s7] sm:$0xf]
  %v428 = vld [vmem:[%s7 + $0x4] sm:$0xf]
  %v429 = vld [vmem:[%s7 + $0x8] sm:$0xf]
  %v430 = vld [vmem:[%s7 + $0xc] sm:$0xf]
  %v433 = vcombine.high %v39, %v39
  %v434 = vcombine.high %v40, %v40
  %v437 = vpack.c.bf16 %v39, %v39
  %v438 = vpack.c.bf16 %v433, %v433
  %v439 = vpack.c.bf16 %v40, %v40
  %v440 = vpack.c.bf16 %v434, %v434
  %v441 = vld [vmem:[%s8] sm:$0xf]
  %v442 = vld [vmem:[%s8 + $0x4] sm:$0xf]
  %v443 = vld [vmem:[%s8 + $0x8] sm:$0xf]
  %v444 = vld [vmem:[%s8 + $0xc] sm:$0xf]
  %v445 = vpack.c.bf16 %v415, %v411
  %v446 = vpack.c.bf16 %v416, %v412
  %v447 = vpack.c.bf16 %v417, %v413
  %v448 = vpack.c.bf16 %v418, %v414
  %v449 = vpack.c.bf16 %v423, %v419
  %v450 = vpack.c.bf16 %v424, %v420
  %v451 = vpack.c.bf16 %v425, %v421
  %v452 = vpack.c.bf16 %v426, %v422
  %v457 = vunpack.c.l.b16 %v441
  %v458 = vunpack.c.l.b16 %v442
  %v459 = vunpack.c.l.b16 %v443
  %v460 = vunpack.c.l.b16 %v444
  %v461 = vpack.c.b16 %v458, %v457
  %v462 = vpack.c.b16 %v460, %v459
  %v464 = vsel %vm298, %v461, 0
  %v467 = vsel %vm298, %v462, 0
  %469 = vmatprep.subr.bf16.mxu0 %v446
  %470 = vmatpush1.bf16.msra.mxu0 %v445
  %471 = vmatprep.subr.bf16.mxu0 %v450
  %472 = vmatpush1.bf16.msra.mxu0 %v449
  %473 = vmatprep.subr.bf16.mxu0 0
  %474 = vmatpush1.bf16.msra.mxu0 0
  %475 = vmatprep.subr.bf16.mxu0 0
  %476 = vmatpush1.bf16.msra.mxu0 0
  %477 = vmatprep.subr.bf16.mxu0 0
  %478 = vmatpush1.bf16.msra.mxu0 0
  %479 = vmatprep.subr.bf16.mxu0 0
  %480 = vmatpush1.bf16.msra.mxu0 0
  %481 = vmatprep.subr.bf16.mxu0 0
  %482 = vmatpush1.bf16.msra.mxu0 0
  %483 = vmatprep.subr.bf16.mxu0 0
  %484 = vmatpush1.bf16.msra.mxu0 0
  %485 = vmatprep.subr.bf16.mxu0 0
  %486 = vmatpush1.bf16.msra.mxu0 0
  %487 = vmatprep.subr.bf16.mxu0 0
  %488 = vmatpush1.bf16.msra.mxu0 0
  %489 = vmatprep.subr.bf16.mxu0 0
  %490 = vmatpush1.bf16.msra.mxu0 0
  %491 = vmatprep.subr.bf16.mxu0 0
  %492 = vmatpush1.bf16.msra.mxu0 0
  %493 = vmatprep.subr.bf16.mxu0 0
  %494 = vmatpush1.bf16.msra.mxu0 0
  %495 = vmatprep.subr.bf16.mxu0 0
  %496 = vmatpush1.bf16.msra.mxu0 0
  %497 = vmatprep.subr.bf16.mxu0 0
  %498 = vmatpush1.bf16.msra.mxu0 0
  %499 = vmatprep.subr.bf16.mxu0 0
  %500 = vmatpush1.bf16.msra.mxu0 0
  %501 = vmatprep.mubr.bf16.mxu0 0
  %502 = vmatmul.mubr.bf16.gmra.mrb[0].mxu0 %v464
  %v503 = vpop.f32.mrb[0].mxu0
  %v504 = vadd.f32 0.0, %v503
  %v505 = vpop.f32.mrb[0].mxu0
  %v506 = vadd.f32 0.0, %v505
  %v507 = vpop.f32.mrb[0].mxu0
  %v508 = vadd.f32 0.0, %v507
  %v509 = vpop.f32.mrb[0].mxu0
  %v510 = vadd.f32 0.0, %v509
  %511 = vmatprep.mubr.bf16.mxu0 0
  %512 = vmatmul.mubr.bf16.gmra.mrb[0].mxu0 %v467
  %v513 = vpop.f32.mrb[0].mxu0
  %v514 = vadd.f32 0.0, %v513
  %v515 = vpop.f32.mrb[0].mxu0
  %v516 = vadd.f32 0.0, %v515
  %v517 = vpop.f32.mrb[0].mxu0
  %v518 = vadd.f32 0.0, %v517
  %v519 = vpop.f32.mrb[0].mxu0
  %v520 = vadd.f32 0.0, %v519
  %521 = vdwg.mxu0
  %522 = vmatprep.subr.bf16.mxu0 %v448
  %523 = vmatpush1.bf16.msra.mxu0 %v447
  %524 = vmatprep.subr.bf16.mxu0 %v452
  %525 = vmatpush1.bf16.msra.mxu0 %v451
  %526 = vmatprep.subr.bf16.mxu0 0
  %527 = vmatpush1.bf16.msra.mxu0 0
  %528 = vmatprep.subr.bf16.mxu0 0
  %529 = vmatpush1.bf16.msra.mxu0 0
  %530 = vmatprep.subr.bf16.mxu0 0
  %531 = vmatpush1.bf16.msra.mxu0 0
  %532 = vmatprep.subr.bf16.mxu0 0
  %533 = vmatpush1.bf16.msra.mxu0 0
  %534 = vmatprep.subr.bf16.mxu0 0
  %535 = vmatpush1.bf16.msra.mxu0 0
  %536 = vmatprep.subr.bf16.mxu0 0
  %537 = vmatpush1.bf16.msra.mxu0 0
  %538 = vmatprep.subr.bf16.mxu0 0
  %539 = vmatpush1.bf16.msra.mxu0 0
  %540 = vmatprep.subr.bf16.mxu0 0
  %541 = vmatpush1.bf16.msra.mxu0 0
  %542 = vmatprep.subr.bf16.mxu0 0
  %543 = vmatpush1.bf16.msra.mxu0 0
  %544 = vmatprep.subr.bf16.mxu0 0
  %545 = vmatpush1.bf16.msra.mxu0 0
  %546 = vmatprep.subr.bf16.mxu0 0
  %547 = vmatpush1.bf16.msra.mxu0 0
  %548 = vmatprep.subr.bf16.mxu0 0
  %549 = vmatpush1.bf16.msra.mxu0 0
  %550 = vmatprep.subr.bf16.mxu0 0
  %551 = vmatpush1.bf16.msra.mxu0 0
  %552 = vmatprep.subr.bf16.mxu0 0
  %553 = vmatpush1.bf16.msra.mxu0 0
  %554 = vmatprep.mubr.bf16.mxu0 0
  %555 = vmatmul.mubr.bf16.gmra.mrb[0].mxu0 %v464
  %v556 = vpop.f32.mrb[0].mxu0
  %v557 = vadd.f32 0.0, %v556
  %v558 = vpop.f32.mrb[0].mxu0
  %v559 = vadd.f32 0.0, %v558
  %v560 = vpop.f32.mrb[0].mxu0
  %v561 = vadd.f32 0.0, %v560
  %v562 = vpop.f32.mrb[0].mxu0
  %v563 = vadd.f32 0.0, %v562
  %564 = vmatprep.mubr.bf16.mxu0 0
  %565 = vmatmul.mubr.bf16.gmra.mrb[0].mxu0 %v467
  %v566 = vpop.f32.mrb[0].mxu0
  %v567 = vadd.f32 0.0, %v566
  %v568 = vpop.f32.mrb[0].mxu0
  %v569 = vadd.f32 0.0, %v568
  %v570 = vpop.f32.mrb[0].mxu0
  %v571 = vadd.f32 0.0, %v570
  %v572 = vpop.f32.mrb[0].mxu0
  %v573 = vadd.f32 0.0, %v572
  %574 = vdwg.mxu0
  %v579 = vunpack.c.l.b16 %v427
  %v580 = vunpack.c.l.b16 %v428
  %v581 = vunpack.c.l.b16 %v429
  %v582 = vunpack.c.l.b16 %v430
  %v583 = vpack.c.b16 %v580, %v579
  %v584 = vpack.c.b16 %v582, %v581
  %vm585 = vcmask 31744
  %v587 = vsel %vm585, %v583, 0
  %v590 = vsel %vm585, %v584, 0
  %v593 = vsel %vm115, %v437, 0
  %v596 = vsel %vm115, %v438, 0
  %v599 = vsel %vm115, %v439, 0
  %v602 = vsel %vm115, %v440, 0
  %604 = vmatprep.subr.bf16.mxu0 %v596
  %605 = vmatpush1.bf16.msra.mxu0 %v593
  %606 = vmatprep.subr.bf16.mxu0 0
  %607 = vmatpush1.bf16.msra.mxu0 0
  %608 = vmatprep.subr.bf16.mxu0 0
  %609 = vmatpush1.bf16.msra.mxu0 0
  %610 = vmatprep.subr.bf16.mxu0 0
  %611 = vmatpush1.bf16.msra.mxu0 0
  %612 = vmatprep.subr.bf16.mxu0 0
  %613 = vmatpush1.bf16.msra.mxu0 0
  %614 = vmatprep.subr.bf16.mxu0 0
  %615 = vmatpush1.bf16.msra.mxu0 0
  %616 = vmatprep.subr.bf16.mxu0 0
  %617 = vmatpush1.bf16.msra.mxu0 0
  %618 = vmatprep.subr.bf16.mxu0 0
  %619 = vmatpush1.bf16.msra.mxu0 0
  %620 = vmatprep.subr.bf16.mxu0 0
  %621 = vmatpush1.bf16.msra.mxu0 0
  %622 = vmatprep.subr.bf16.mxu0 0
  %623 = vmatpush1.bf16.msra.mxu0 0
  %624 = vmatprep.subr.bf16.mxu0 0
  %625 = vmatpush1.bf16.msra.mxu0 0
  %626 = vmatprep.subr.bf16.mxu0 0
  %627 = vmatpush1.bf16.msra.mxu0 0
  %628 = vmatprep.subr.bf16.mxu0 0
  %629 = vmatpush1.bf16.msra.mxu0 0
  %630 = vmatprep.subr.bf16.mxu0 0
  %631 = vmatpush1.bf16.msra.mxu0 0
  %632 = vmatprep.subr.bf16.mxu0 0
  %633 = vmatpush1.bf16.msra.mxu0 0
  %634 = vmatprep.subr.bf16.mxu0 0
  %635 = vmatpush1.bf16.msra.mxu0 0
  %636 = vmatprep.mubr.bf16.mxu0 0
  %637 = vmatmul.mubr.bf16.gmra.mrb[0].mxu0 %v587
  %v638 = vpop.f32.mrb[0].mxu0
  %v639 = vadd.f32 %v504, %v638
  %v640 = vpop.f32.mrb[0].mxu0
  %v641 = vadd.f32 %v506, %v640
  %v642 = vpop.f32.mrb[0].mxu0
  %v643 = vadd.f32 %v508, %v642
  %v644 = vpop.f32.mrb[0].mxu0
  %v645 = vadd.f32 %v510, %v644
  %646 = vmatprep.mubr.bf16.mxu0 0
  %647 = vmatmul.mubr.bf16.gmra.mrb[0].mxu0 %v590
  %v648 = vpop.f32.mrb[0].mxu0
  %v649 = vadd.f32 %v514, %v648
  %v650 = vpop.f32.mrb[0].mxu0
  %v651 = vadd.f32 %v516, %v650
  %v652 = vpop.f32.mrb[0].mxu0
  %v653 = vadd.f32 %v518, %v652
  %v654 = vpop.f32.mrb[0].mxu0
  %v655 = vadd.f32 %v520, %v654
  %656 = vdwg.mxu0
  %657 = vmatprep.subr.bf16.mxu0 %v602
  %658 = vmatpush1.bf16.msra.mxu0 %v599
  %659 = vmatprep.subr.bf16.mxu0 0
  %660 = vmatpush1.bf16.msra.mxu0 0
  %661 = vmatprep.subr.bf16.mxu0 0
  %662 = vmatpush1.bf16.msra.mxu0 0
  %663 = vmatprep.subr.bf16.mxu0 0
  %664 = vmatpush1.bf16.msra.mxu0 0
  %665 = vmatprep.subr.bf16.mxu0 0
  %666 = vmatpush1.bf16.msra.mxu0 0
  %667 = vmatprep.subr.bf16.mxu0 0
  %668 = vmatpush1.bf16.msra.mxu0 0
  %669 = vmatprep.subr.bf16.mxu0 0
  %670 = vmatpush1.bf16.msra.mxu0 0
  %671 = vmatprep.subr.bf16.mxu0 0
  %672 = vmatpush1.bf16.msra.mxu0 0
  %673 = vmatprep.subr.bf16.mxu0 0
  %674 = vmatpush1.bf16.msra.mxu0 0
  %675 = vmatprep.subr.bf16.mxu0 0
  %676 = vmatpush1.bf16.msra.mxu0 0
  %677 = vmatprep.subr.bf16.mxu0 0
  %678 = vmatpush1.bf16.msra.mxu0 0
  %679 = vmatprep.subr.bf16.mxu0 0
  %680 = vmatpush1.bf16.msra.mxu0 0
  %681 = vmatprep.subr.bf16.mxu0 0
  %682 = vmatpush1.bf16.msra.mxu0 0
  %683 = vmatprep.subr.bf16.mxu0 0
  %684 = vmatpush1.bf16.msra.mxu0 0
  %685 = vmatprep.subr.bf16.mxu0 0
  %686 = vmatpush1.bf16.msra.mxu0 0
  %687 = vmatprep.subr.bf16.mxu0 0
  %688 = vmatpush1.bf16.msra.mxu0 0
  %689 = vmatprep.mubr.bf16.mxu0 0
  %690 = vmatmul.mubr.bf16.gmra.mrb[0].mxu0 %v587
  %v691 = vpop.f32.mrb[0].mxu0
  %v692 = vadd.f32 %v557, %v691
  %v693 = vpop.f32.mrb[0].mxu0
  %v694 = vadd.f32 %v559, %v693
  %v695 = vpop.f32.mrb[0].mxu0
  %v696 = vadd.f32 %v561, %v695
  %v697 = vpop.f32.mrb[0].mxu0
  %v698 = vadd.f32 %v563, %v697
  %699 = vmatprep.mubr.bf16.mxu0 0
  %700 = vmatmul.mubr.bf16.gmra.mrb[0].mxu0 %v590
  %v701 = vpop.f32.mrb[0].mxu0
  %v702 = vadd.f32 %v567, %v701
  %v703 = vpop.f32.mrb[0].mxu0
  %v704 = vadd.f32 %v569, %v703
  %v705 = vpop.f32.mrb[0].mxu0
  %v706 = vadd.f32 %v571, %v705
  %v707 = vpop.f32.mrb[0].mxu0
  %v708 = vadd.f32 %v573, %v707
  %709 = vdwg.mxu0
  %v710 = vld [vmem:[%s9] sm:$0xf]
  %v711 = vld [vmem:[%s9 + $0x4] sm:$0xf]
  %v712 = vld [vmem:[%s9 + $0x8] sm:$0xf]
  %v713 = vld [vmem:[%s9 + $0xc] sm:$0xf]
  %v718 = vunpack.c.l.b16 %v710
  %v719 = vunpack.c.l.b16 %v711
  %v720 = vunpack.c.l.b16 %v712
  %v721 = vunpack.c.l.b16 %v713
  %v722 = vpack.c.b16 %v719, %v718
  %v723 = vpack.c.b16 %v721, %v720
  %v725 = vsel %vm107, %v722, 0
  %v728 = vsel %vm107, %v723, 0
  %v731 = vand.u32 %v65, %v117
  %v734 = vand.u32 %v66, %v117
  %v737 = vand.u32 %v67, %v117
  %v740 = vand.u32 %v68, %v117
  %742 = vmatprep.subr.bf16.mxu0 %v734
  %743 = vmatpush1.bf16.msra.mxu0 %v731
  %744 = vmatprep.subr.bf16.mxu0 0
  %745 = vmatpush1.bf16.msra.mxu0 0
  %746 = vmatprep.subr.bf16.mxu0 0
  %747 = vmatpush1.bf16.msra.mxu0 0
  %748 = vmatprep.subr.bf16.mxu0 0
  %749 = vmatpush1.bf16.msra.mxu0 0
  %750 = vmatprep.subr.bf16.mxu0 0
  %751 = vmatpush1.bf16.msra.mxu0 0
  %752 = vmatprep.subr.bf16.mxu0 0
  %753 = vmatpush1.bf16.msra.mxu0 0
  %754 = vmatprep.subr.bf16.mxu0 0
  %755 = vmatpush1.bf16.msra.mxu0 0
  %756 = vmatprep.subr.bf16.mxu0 0
  %757 = vmatpush1.bf16.msra.mxu0 0
  %758 = vmatprep.subr.bf16.mxu0 0
  %759 = vmatpush1.bf16.msra.mxu0 0
  %760 = vmatprep.subr.bf16.mxu0 0
  %761 = vmatpush1.bf16.msra.mxu0 0
  %762 = vmatprep.subr.bf16.mxu0 0
  %763 = vmatpush1.bf16.msra.mxu0 0
  %764 = vmatprep.subr.bf16.mxu0 0
  %765 = vmatpush1.bf16.msra.mxu0 0
  %766 = vmatprep.subr.bf16.mxu0 0
  %767 = vmatpush1.bf16.msra.mxu0 0
  %768 = vmatprep.subr.bf16.mxu0 0
  %769 = vmatpush1.bf16.msra.mxu0 0
  %770 = vmatprep.subr.bf16.mxu0 0
  %771 = vmatpush1.bf16.msra.mxu0 0
  %772 = vmatprep.subr.bf16.mxu0 0
  %773 = vmatpush1.bf16.msra.mxu0 0
  %774 = vmatprep.mubr.bf16.mxu0 0
  %775 = vmatmul.mubr.bf16.gmra.mrb[0].mxu0 %v725
  %v776 = vpop.f32.mrb[0].mxu0
  %v777 = vadd.f32 0.0, %v776
  %v778 = vpop.f32.mrb[0].mxu0
  %v779 = vadd.f32 0.0, %v778
  %v780 = vpop.f32.mrb[0].mxu0
  %v781 = vadd.f32 0.0, %v780
  %v782 = vpop.f32.mrb[0].mxu0
  %v783 = vadd.f32 0.0, %v782
  %784 = vmatprep.mubr.bf16.mxu0 0
  %785 = vmatmul.mubr.bf16.gmra.mrb[0].mxu0 %v728
  %v786 = vpop.f32.mrb[0].mxu0
  %v787 = vadd.f32 0.0, %v786
  %v788 = vpop.f32.mrb[0].mxu0
  %v789 = vadd.f32 0.0, %v788
  %v790 = vpop.f32.mrb[0].mxu0
  %v791 = vadd.f32 0.0, %v790
  %v792 = vpop.f32.mrb[0].mxu0
  %v793 = vadd.f32 0.0, %v792
  %794 = vdwg.mxu0
  %795 = vmatprep.subr.bf16.mxu0 %v740
  %796 = vmatpush1.bf16.msra.mxu0 %v737
  %797 = vmatprep.subr.bf16.mxu0 0
  %798 = vmatpush1.bf16.msra.mxu0 0
  %799 = vmatprep.subr.bf16.mxu0 0
  %800 = vmatpush1.bf16.msra.mxu0 0
  %801 = vmatprep.subr.bf16.mxu0 0
  %802 = vmatpush1.bf16.msra.mxu0 0
  %803 = vmatprep.subr.bf16.mxu0 0
  %804 = vmatpush1.bf16.msra.mxu0 0
  %805 = vmatprep.subr.bf16.mxu0 0
  %806 = vmatpush1.bf16.msra.mxu0 0
  %807 = vmatprep.subr.bf16.mxu0 0
  %808 = vmatpush1.bf16.msra.mxu0 0
  %809 = vmatprep.subr.bf16.mxu0 0
  %810 = vmatpush1.bf16.msra.mxu0 0
  %811 = vmatprep.subr.bf16.mxu0 0
  %812 = vmatpush1.bf16.msra.mxu0 0
  %813 = vmatprep.subr.bf16.mxu0 0
  %814 = vmatpush1.bf16.msra.mxu0 0
  %815 = vmatprep.subr.bf16.mxu0 0
  %816 = vmatpush1.bf16.msra.mxu0 0
  %817 = vmatprep.subr.bf16.mxu0 0
  %818 = vmatpush1.bf16.msra.mxu0 0
  %819 = vmatprep.subr.bf16.mxu0 0
  %820 = vmatpush1.bf16.msra.mxu0 0
  %821 = vmatprep.subr.bf16.mxu0 0
  %822 = vmatpush1.bf16.msra.mxu0 0
  %823 = vmatprep.subr.bf16.mxu0 0
  %824 = vmatpush1.bf16.msra.mxu0 0
  %825 = vmatprep.subr.bf16.mxu0 0
  %826 = vmatpush1.bf16.msra.mxu0 0
  %827 = vmatprep.mubr.bf16.mxu0 0
  %828 = vmatmul.mubr.bf16.gmra.mrb[0].mxu0 %v725
  %v829 = vpop.f32.mrb[0].mxu0
  %v830 = vadd.f32 0.0, %v829
  %v831 = vpop.f32.mrb[0].mxu0
  %v832 = vadd.f32 0.0, %v831
  %v833 = vpop.f32.mrb[0].mxu0
  %v834 = vadd.f32 0.0, %v833
  %v835 = vpop.f32.mrb[0].mxu0
  %v836 = vadd.f32 0.0, %v835
  %837 = vmatprep.mubr.bf16.mxu0 0
  %838 = vmatmul.mubr.bf16.gmra.mrb[0].mxu0 %v728
  %v839 = vpop.f32.mrb[0].mxu0
  %v840 = vadd.f32 0.0, %v839
  %v841 = vpop.f32.mrb[0].mxu0
  %v842 = vadd.f32 0.0, %v841
  %v843 = vpop.f32.mrb[0].mxu0
  %v844 = vadd.f32 0.0, %v843
  %v845 = vpop.f32.mrb[0].mxu0
  %v846 = vadd.f32 0.0, %v845
  %847 = vdwg.mxu0
  %v848 = vadd.f32 %v639, %v777
  %v849 = vadd.f32 %v641, %v779
  %v850 = vadd.f32 %v692, %v830
  %v851 = vadd.f32 %v694, %v832
  %v852 = vadd.f32 %v643, %v781
  %v853 = vadd.f32 %v645, %v783
  %v854 = vadd.f32 %v696, %v834
  %v855 = vadd.f32 %v698, %v836
  %v856 = vadd.f32 %v649, %v787
  %v857 = vadd.f32 %v651, %v789
  %v858 = vadd.f32 %v702, %v840
  %v859 = vadd.f32 %v704, %v842
  %v860 = vadd.f32 %v653, %v791
  %v861 = vadd.f32 %v655, %v793
  %v862 = vadd.f32 %v706, %v844
  %v863 = vadd.f32 %v708, %v846
  %v864 = vld [vmem:[%s10] sm:$0xff]
  %v865 = vld [vmem:[%s10 + $0x8] sm:$0xff]
  %v866 = vld [vmem:[%s10 + $0x10] sm:$0xff]
  %v867 = vld [vmem:[%s10 + $0x18] sm:$0xff]
  %869 = vset.pattern.permute.xlu0 0
  %870 = vperm.xlu0 %869, %v864
  %v871 = vpop.permute.xlu0 %870
  %874 = vset.pattern.permute.xlu0 0
  %875 = vperm.xlu0 %874, %v865
  %v876 = vpop.permute.xlu0 %875
  %879 = vset.pattern.permute.xlu0 0
  %880 = vperm.xlu0 %879, %v866
  %v881 = vpop.permute.xlu0 %880
  %884 = vset.pattern.permute.xlu0 0
  %885 = vperm.xlu0 %884, %v867
  %v886 = vpop.permute.xlu0 %885
  %v888 = vadd.f32 %v848, %v871
  %v889 = vadd.f32 %v849, %v871
  %v890 = vadd.f32 %v850, %v871
  %v891 = vadd.f32 %v851, %v871
  %v892 = vadd.f32 %v852, %v876
  %v893 = vadd.f32 %v853, %v876
  %v894 = vadd.f32 %v854, %v876
  %v895 = vadd.f32 %v855, %v876
  %v896 = vadd.f32 %v856, %v881
  %v897 = vadd.f32 %v857, %v881
  %v898 = vadd.f32 %v858, %v881
  %v899 = vadd.f32 %v859, %v881
  %v900 = vadd.f32 %v860, %v886
  %v901 = vadd.f32 %v861, %v886
  %v902 = vadd.f32 %v862, %v886
  %v903 = vadd.f32 %v863, %v886
  %v904 = vmax.f32 %v888, 0.0
  %v905 = vmax.f32 %v889, 0.0
  %v906 = vmax.f32 %v890, 0.0
  %v907 = vmax.f32 %v891, 0.0
  %v908 = vmax.f32 %v892, 0.0
  %v909 = vmax.f32 %v893, 0.0
  %v910 = vmax.f32 %v894, 0.0
  %v911 = vmax.f32 %v895, 0.0
  %v912 = vmax.f32 %v896, 0.0
  %v913 = vmax.f32 %v897, 0.0
  %v914 = vmax.f32 %v898, 0.0
  %v915 = vmax.f32 %v899, 0.0
  %v916 = vmax.f32 %v900, 0.0
  %v917 = vmax.f32 %v901, 0.0
  %v918 = vmax.f32 %v902, 0.0
  %v919 = vmax.f32 %v903, 0.0
  %v920 = vpack.c.bf16 %v908, %v904
  %v921 = vpack.c.bf16 %v909, %v905
  %v922 = vpack.c.bf16 %v910, %v906
  %v923 = vpack.c.bf16 %v911, %v907
  %v924 = vpack.c.bf16 %v916, %v912
  %v925 = vpack.c.bf16 %v917, %v913
  %v926 = vpack.c.bf16 %v918, %v914
  %v927 = vpack.c.bf16 %v919, %v915
  %v936 = vunpack.c.l.b16 %v920
  %v937 = vunpack.c.l.b16 %v921
  %v938 = vunpack.c.l.b16 %v922
  %v939 = vunpack.c.l.b16 %v923
  %v940 = vunpack.c.h.b16 %v920
  %v941 = vunpack.c.h.b16 %v921
  %v942 = vunpack.c.h.b16 %v922
  %v943 = vunpack.c.h.b16 %v923
  %v944 = vunpack.c.l.b16 %v924
  %v945 = vunpack.c.l.b16 %v925
  %v946 = vunpack.c.l.b16 %v926
  %v947 = vunpack.c.l.b16 %v927
  %v948 = vunpack.c.h.b16 %v924
  %v949 = vunpack.c.h.b16 %v925
  %v950 = vunpack.c.h.b16 %v926
  %v951 = vunpack.c.h.b16 %v927
  %v952 = vpack.c.b16 %v937, %v936
  %v953 = vpack.c.b16 %v939, %v938
  %v954 = vpack.c.b16 %v941, %v940
  %v955 = vpack.c.b16 %v943, %v942
  %v956 = vpack.c.b16 %v945, %v944
  %v957 = vpack.c.b16 %v947, %v946
  %v958 = vpack.c.b16 %v949, %v948
  %v959 = vpack.c.b16 %v951, %v950
  %968 = vst [vmem:[%s11] sm:$0xff] %v952
  %969 = vst [vmem:[%s11 + $0x8] sm:$0xff] %v953
  %970 = vst [vmem:[%s11 + $0x10] sm:$0xff] %v954
  %971 = vst [vmem:[%s11 + $0x18] sm:$0xff] %v955
  %972 = vst [vmem:[%s11 + $0x20] sm:$0xff] %v956
  %973 = vst [vmem:[%s11 + $0x28] sm:$0xff] %v957
  %974 = vst [vmem:[%s11 + $0x30] sm:$0xff] %v958
  %975 = vst [vmem:[%s11 + $0x38] sm:$0xff] %v959
  // Predicated region
  $region46: #{_forward_core.2} parent=0 // pred_check
    _
  $region47: #{_forward_core.2} parent=0 // pred_check_branch
    %977 = sbr.rel (0) target = $region49
  $region48: #{_forward_core.2} parent=0 // pred_region
    _
  $region49: #{_forward_core.2} parent=0 // pred_fallthru
    _
  // Predicated region
  $region50: #{_forward_core.2} parent=0 // pred_check
    _
  $region51: #{_forward_core.2} parent=0 // pred_check_branch
    %979 = sbr.rel (0) target = $region53
  $region52: #{_forward_core.2} parent=0 // pred_region
    _
  $region53: #{_forward_core.2} parent=0 // pred_fallthru
    _

// kernel: _forward_core.3
$region0: #{_forward_core.3}
  #allocation0 [shape = 'u32[]', space=smem, size = 0x4, offset = 0x4, fixed_abs, tag = 'smem constant byte address 0x4 - core index']
  #allocation1 [shape = 'u32[144,128]{1,0:T(1,128)}', space=vmem, size = 0x12000, scoped, tag = 'internal scratch']
  %s0 = inlined_call_operand.vmem [shape: bf16[32,512], index: 0, kind: input, shape index: {}]
  %s1 = inlined_call_operand.vmem [shape: bf16[32,512], index: 1, kind: input, shape index: {}]
  %s2 = inlined_call_operand.vmem [shape: bf16[32,32], index: 2, kind: input, shape index: {}]
  %s3 = inlined_call_operand.vmem [shape: bf16[32,32], index: 3, kind: input, shape index: {}]
  %s4 = inlined_call_operand.vmem [shape: f32[32,1], index: 4, kind: input, shape index: {}]
  %s5 = inlined_call_operand.vmem [shape: bf16[32,512], index: 5, kind: output, shape index: {}]
  %s6 = sld [smem:[#allocation0]]
  $region30: #{_forward_core.3} parent=0
    _
  %s8 = ssub.s32 1, %s6
  %s9 = scalar_select 0, %s8, %s6
  // Predicated region
  $region2: #{_forward_core.3} parent=0 // pred_check
    _
  $region3: #{_forward_core.3} parent=0 // pred_check_branch
    %11 = sbr.rel (0) target = $region5
  $region4: #{_forward_core.3} parent=0 // pred_region
    _
  $region5: #{_forward_core.3} parent=0 // pred_fallthru
    _
  // Predicated region
  $region6: #{_forward_core.3} parent=0 // pred_check
    _
  $region7: #{_forward_core.3} parent=0 // pred_check_branch
    %13 = sbr.rel (0) target = $region9
  $region8: #{_forward_core.3} parent=0 // pred_region
    _
  $region9: #{_forward_core.3} parent=0 // pred_fallthru
    _
  // Predicated region
  $region10: #{_forward_core.3} parent=0 // pred_check
    _
  $region11: #{_forward_core.3} parent=0 // pred_check_branch
    %15 = sbr.rel (0) target = $region13
  $region12: #{_forward_core.3} parent=0 // pred_region
    _
  $region13: #{_forward_core.3} parent=0 // pred_fallthru
    _
  // Predicated region
  $region14: #{_forward_core.3} parent=0 // pred_check
    _
  $region15: #{_forward_core.3} parent=0 // pred_check_branch
    %17 = sbr.rel (0) target = $region17
  $region16: #{_forward_core.3} parent=0 // pred_region
    _
  $region17: #{_forward_core.3} parent=0 // pred_fallthru
    _
  // Predicated region
  $region18: #{_forward_core.3} parent=0 // pred_check
    _
  $region19: #{_forward_core.3} parent=0 // pred_check_branch
    %19 = sbr.rel (0) target = $region21
  $region20: #{_forward_core.3} parent=0 // pred_region
    _
  $region21: #{_forward_core.3} parent=0 // pred_fallthru
    _
  %v21 = vld [vmem:[%s2] sm:$0xf]
  %v22 = vld [vmem:[%s2 + $0x4] sm:$0xf]
  %v23 = vld [vmem:[%s2 + $0x8] sm:$0xf]
  %v24 = vld [vmem:[%s2 + $0xc] sm:$0xf]
  %v25 = vld [vmem:[%s0] sm:$0xff]
  %v26 = vld [vmem:[%s0 + $0x8] sm:$0xff]
  %v27 = vld [vmem:[%s0 + $0x10] sm:$0xff]
  %v28 = vld [vmem:[%s0 + $0x18] sm:$0xff]
  %v29 = vld [vmem:[%s0 + $0x20] sm:$0xff]
  %v30 = vld [vmem:[%s0 + $0x28] sm:$0xff]
  %v31 = vld [vmem:[%s0 + $0x30] sm:$0xff]
  %v32 = vld [vmem:[%s0 + $0x38] sm:$0xff]
  %v33 = vld [vmem:[%s3] sm:$0xf]
  %v34 = vld [vmem:[%s3 + $0x4] sm:$0xf]
  %v35 = vld [vmem:[%s3 + $0x8] sm:$0xf]
  %v36 = vld [vmem:[%s3 + $0xc] sm:$0xf]
  %v37 = vld [vmem:[%s1] sm:$0xff]
  %v38 = vld [vmem:[%s1 + $0x8] sm:$0xff]
  %v39 = vld [vmem:[%s1 + $0x10] sm:$0xff]
  %v40 = vld [vmem:[%s1 + $0x18] sm:$0xff]
  %v41 = vld [vmem:[%s1 + $0x20] sm:$0xff]
  %v42 = vld [vmem:[%s1 + $0x28] sm:$0xff]
  %v43 = vld [vmem:[%s1 + $0x30] sm:$0xff]
  %v44 = vld [vmem:[%s1 + $0x38] sm:$0xff]
  %v49 = vunpack.c.l.b16 %v33
  %v50 = vunpack.c.l.b16 %v34
  %v51 = vunpack.c.l.b16 %v35
  %v52 = vunpack.c.l.b16 %v36
  %v53 = vpack.c.b16 %v50, %v49
  %v54 = vpack.c.b16 %v52, %v51
  %v63 = vunpack.c.l.b16 %v37
  %v64 = vunpack.c.h.b16 %v37
  %v65 = vunpack.c.l.b16 %v38
  %v66 = vunpack.c.h.b16 %v38
  %v67 = vunpack.c.l.b16 %v39
  %v68 = vunpack.c.h.b16 %v39
  %v69 = vunpack.c.l.b16 %v40
  %v70 = vunpack.c.h.b16 %v40
  %v71 = vunpack.c.l.b16 %v41
  %v72 = vunpack.c.h.b16 %v41
  %v73 = vunpack.c.l.b16 %v42
  %v74 = vunpack.c.h.b16 %v42
  %v75 = vunpack.c.l.b16 %v43
  %v76 = vunpack.c.h.b16 %v43
  %v77 = vunpack.c.l.b16 %v44
  %v78 = vunpack.c.h.b16 %v44
  %v79 = vpack.c.b16 %v67, %v63
  %v80 = vpack.c.b16 %v68, %v64
  %v81 = vpack.c.b16 %v69, %v65
  %v82 = vpack.c.b16 %v70, %v66
  %v83 = vpack.c.b16 %v75, %v71
  %v84 = vpack.c.b16 %v76, %v72
  %v85 = vpack.c.b16 %v77, %v73
  %v86 = vpack.c.b16 %v78, %v74
  %vm95 = vcmask 261120
  %v97 = vsel %vm95, %v53, 0
  %v100 = vsel %vm95, %v54, 0
  %102 = vmatprep.subr.bf16.mxu0 %v80
  %103 = vmatpush1.bf16.msra.mxu0 %v79
  %104 = vmatprep.subr.bf16.mxu0 %v84
  %105 = vmatpush1.bf16.msra.mxu0 %v83
  %106 = vmatprep.subr.bf16.mxu0 0
  %107 = vmatpush1.bf16.msra.mxu0 0
  %108 = vmatprep.subr.bf16.mxu0 0
  %109 = vmatpush1.bf16.msra.mxu0 0
  %110 = vmatprep.subr.bf16.mxu0 0
  %111 = vmatpush1.bf16.msra.mxu0 0
  %112 = vmatprep.subr.bf16.mxu0 0
  %113 = vmatpush1.bf16.msra.mxu0 0
  %114 = vmatprep.subr.bf16.mxu0 0
  %115 = vmatpush1.bf16.msra.mxu0 0
  %116 = vmatprep.subr.bf16.mxu0 0
  %117 = vmatpush1.bf16.msra.mxu0 0
  %118 = vmatprep.subr.bf16.mxu0 0
  %119 = vmatpush1.bf16.msra.mxu0 0
  %120 = vmatprep.subr.bf16.mxu0 0
  %121 = vmatpush1.bf16.msra.mxu0 0
  %122 = vmatprep.subr.bf16.mxu0 0
  %123 = vmatpush1.bf16.msra.mxu0 0
  %124 = vmatprep.subr.bf16.mxu0 0
  %125 = vmatpush1.bf16.msra.mxu0 0
  %126 = vmatprep.subr.bf16.mxu0 0
  %127 = vmatpush1.bf16.msra.mxu0 0
  %128 = vmatprep.subr.bf16.mxu0 0
  %129 = vmatpush1.bf16.msra.mxu0 0
  %130 = vmatprep.subr.bf16.mxu0 0
  %131 = vmatpush1.bf16.msra.mxu0 0
  %132 = vmatprep.subr.bf16.mxu0 0
  %133 = vmatpush1.bf16.msra.mxu0 0
  %134 = vmatprep.mubr.bf16.mxu0 0
  %135 = vmatmul.mubr.bf16.gmra.mrb[0].mxu0 %v97
  %v136 = vpop.f32.mrb[0].mxu0
  %v137 = vadd.f32 0.0, %v136
  %v138 = vpop.f32.mrb[0].mxu0
  %v139 = vadd.f32 0.0, %v138
  %v140 = vpop.f32.mrb[0].mxu0
  %v141 = vadd.f32 0.0, %v140
  %v142 = vpop.f32.mrb[0].mxu0
  %v143 = vadd.f32 0.0, %v142
  %144 = vmatprep.mubr.bf16.mxu0 0
  %145 = vmatmul.mubr.bf16.gmra.mrb[0].mxu0 %v100
  %v146 = vpop.f32.mrb[0].mxu0
  %v147 = vadd.f32 0.0, %v146
  %v148 = vpop.f32.mrb[0].mxu0
  %v149 = vadd.f32 0.0, %v148
  %v150 = vpop.f32.mrb[0].mxu0
  %v151 = vadd.f32 0.0, %v150
  %v152 = vpop.f32.mrb[0].mxu0
  %v153 = vadd.f32 0.0, %v152
  %154 = vdwg.mxu0
  %155 = vmatprep.subr.bf16.mxu0 %v82
  %156 = vmatpush1.bf16.msra.mxu0 %v81
  %157 = vmatprep.subr.bf16.mxu0 %v86
  %158 = vmatpush1.bf16.msra.mxu0 %v85
  %159 = vmatprep.subr.bf16.mxu0 0
  %160 = vmatpush1.bf16.msra.mxu0 0
  %161 = vmatprep.subr.bf16.mxu0 0
  %162 = vmatpush1.bf16.msra.mxu0 0
  %163 = vmatprep.subr.bf16.mxu0 0
  %164 = vmatpush1.bf16.msra.mxu0 0
  %165 = vmatprep.subr.bf16.mxu0 0
  %166 = vmatpush1.bf16.msra.mxu0 0
  %167 = vmatprep.subr.bf16.mxu0 0
  %168 = vmatpush1.bf16.msra.mxu0 0
  %169 = vmatprep.subr.bf16.mxu0 0
  %170 = vmatpush1.bf16.msra.mxu0 0
  %171 = vmatprep.subr.bf16.mxu0 0
  %172 = vmatpush1.bf16.msra.mxu0 0
  %173 = vmatprep.subr.bf16.mxu0 0
  %174 = vmatpush1.bf16.msra.mxu0 0
  %175 = vmatprep.subr.bf16.mxu0 0
  %176 = vmatpush1.bf16.msra.mxu0 0
  %177 = vmatprep.subr.bf16.mxu0 0
  %178 = vmatpush1.bf16.msra.mxu0 0
  %179 = vmatprep.subr.bf16.mxu0 0
  %180 = vmatpush1.bf16.msra.mxu0 0
  %181 = vmatprep.subr.bf16.mxu0 0
  %182 = vmatpush1.bf16.msra.mxu0 0
  %183 = vmatprep.subr.bf16.mxu0 0
  %184 = vmatpush1.bf16.msra.mxu0 0
  %185 = vmatprep.subr.bf16.mxu0 0
  %186 = vmatpush1.bf16.msra.mxu0 0
  %187 = vmatprep.mubr.bf16.mxu0 0
  %188 = vmatmul.mubr.bf16.gmra.mrb[0].mxu0 %v97
  %v189 = vpop.f32.mrb[0].mxu0
  %v190 = vadd.f32 0.0, %v189
  %v191 = vpop.f32.mrb[0].mxu0
  %v192 = vadd.f32 0.0, %v191
  %v193 = vpop.f32.mrb[0].mxu0
  %v194 = vadd.f32 0.0, %v193
  %v195 = vpop.f32.mrb[0].mxu0
  %v196 = vadd.f32 0.0, %v195
  %197 = vmatprep.mubr.bf16.mxu0 0
  %198 = vmatmul.mubr.bf16.gmra.mrb[0].mxu0 %v100
  %v199 = vpop.f32.mrb[0].mxu0
  %v200 = vadd.f32 0.0, %v199
  %v201 = vpop.f32.mrb[0].mxu0
  %v202 = vadd.f32 0.0, %v201
  %v203 = vpop.f32.mrb[0].mxu0
  %v204 = vadd.f32 0.0, %v203
  %v205 = vpop.f32.mrb[0].mxu0
  %v206 = vadd.f32 0.0, %v205
  %207 = vdwg.mxu0
  %v212 = vunpack.c.l.b16 %v21
  %v213 = vunpack.c.l.b16 %v22
  %v214 = vunpack.c.l.b16 %v23
  %v215 = vunpack.c.l.b16 %v24
  %v216 = vpack.c.b16 %v213, %v212
  %v217 = vpack.c.b16 %v215, %v214
  %v226 = vunpack.c.l.b16 %v25
  %v227 = vunpack.c.h.b16 %v25
  %v228 = vunpack.c.l.b16 %v26
  %v229 = vunpack.c.h.b16 %v26
  %v230 = vunpack.c.l.b16 %v27
  %v231 = vunpack.c.h.b16 %v27
  %v232 = vunpack.c.l.b16 %v28
  %v233 = vunpack.c.h.b16 %v28
  %v234 = vunpack.c.l.b16 %v29
  %v235 = vunpack.c.h.b16 %v29
  %v236 = vunpack.c.l.b16 %v30
  %v237 = vunpack.c.h.b16 %v30
  %v238 = vunpack.c.l.b16 %v31
  %v239 = vunpack.c.h.b16 %v31
  %v240 = vunpack.c.l.b16 %v32
  %v241 = vunpack.c.h.b16 %v32
  %v242 = vpack.c.b16 %v230, %v226
  %v243 = vpack.c.b16 %v231, %v227
  %v244 = vpack.c.b16 %v232, %v228
  %v245 = vpack.c.b16 %v233, %v229
  %v246 = vpack.c.b16 %v238, %v234
  %v247 = vpack.c.b16 %v239, %v235
  %v248 = vpack.c.b16 %v240, %v236
  %v249 = vpack.c.b16 %v241, %v237
  %v259 = vsel %vm95, %v216, 0
  %v262 = vsel %vm95, %v217, 0
  %264 = vmatprep.subr.bf16.mxu0 %v243
  %265 = vmatpush1.bf16.msra.mxu0 %v242
  %266 = vmatprep.subr.bf16.mxu0 %v247
  %267 = vmatpush1.bf16.msra.mxu0 %v246
  %268 = vmatprep.subr.bf16.mxu0 0
  %269 = vmatpush1.bf16.msra.mxu0 0
  %270 = vmatprep.subr.bf16.mxu0 0
  %271 = vmatpush1.bf16.msra.mxu0 0
  %272 = vmatprep.subr.bf16.mxu0 0
  %273 = vmatpush1.bf16.msra.mxu0 0
  %274 = vmatprep.subr.bf16.mxu0 0
  %275 = vmatpush1.bf16.msra.mxu0 0
  %276 = vmatprep.subr.bf16.mxu0 0
  %277 = vmatpush1.bf16.msra.mxu0 0
  %278 = vmatprep.subr.bf16.mxu0 0
  %279 = vmatpush1.bf16.msra.mxu0 0
  %280 = vmatprep.subr.bf16.mxu0 0
  %281 = vmatpush1.bf16.msra.mxu0 0
  %282 = vmatprep.subr.bf16.mxu0 0
  %283 = vmatpush1.bf16.msra.mxu0 0
  %284 = vmatprep.subr.bf16.mxu0 0
  %285 = vmatpush1.bf16.msra.mxu0 0
  %286 = vmatprep.subr.bf16.mxu0 0
  %287 = vmatpush1.bf16.msra.mxu0 0
  %288 = vmatprep.subr.bf16.mxu0 0
  %289 = vmatpush1.bf16.msra.mxu0 0
  %290 = vmatprep.subr.bf16.mxu0 0
  %291 = vmatpush1.bf16.msra.mxu0 0
  %292 = vmatprep.subr.bf16.mxu0 0
  %293 = vmatpush1.bf16.msra.mxu0 0
  %294 = vmatprep.subr.bf16.mxu0 0
  %295 = vmatpush1.bf16.msra.mxu0 0
  %296 = vmatprep.mubr.bf16.mxu0 0
  %297 = vmatmul.mubr.bf16.gmra.mrb[0].mxu0 %v259
  %v298 = vpop.f32.mrb[0].mxu0
  %v299 = vadd.f32 %v137, %v298
  %v300 = vpop.f32.mrb[0].mxu0
  %v301 = vadd.f32 %v139, %v300
  %v302 = vpop.f32.mrb[0].mxu0
  %v303 = vadd.f32 %v141, %v302
  %v304 = vpop.f32.mrb[0].mxu0
  %v305 = vadd.f32 %v143, %v304
  %306 = vmatprep.mubr.bf16.mxu0 0
  %307 = vmatmul.mubr.bf16.gmra.mrb[0].mxu0 %v262
  %v308 = vpop.f32.mrb[0].mxu0
  %v309 = vadd.f32 %v147, %v308
  %v310 = vpop.f32.mrb[0].mxu0
  %v311 = vadd.f32 %v149, %v310
  %v312 = vpop.f32.mrb[0].mxu0
  %v313 = vadd.f32 %v151, %v312
  %v314 = vpop.f32.mrb[0].mxu0
  %v315 = vadd.f32 %v153, %v314
  %316 = vdwg.mxu0
  %317 = vmatprep.subr.bf16.mxu0 %v245
  %318 = vmatpush1.bf16.msra.mxu0 %v244
  %319 = vmatprep.subr.bf16.mxu0 %v249
  %320 = vmatpush1.bf16.msra.mxu0 %v248
  %321 = vmatprep.subr.bf16.mxu0 0
  %322 = vmatpush1.bf16.msra.mxu0 0
  %323 = vmatprep.subr.bf16.mxu0 0
  %324 = vmatpush1.bf16.msra.mxu0 0
  %325 = vmatprep.subr.bf16.mxu0 0
  %326 = vmatpush1.bf16.msra.mxu0 0
  %327 = vmatprep.subr.bf16.mxu0 0
  %328 = vmatpush1.bf16.msra.mxu0 0
  %329 = vmatprep.subr.bf16.mxu0 0
  %330 = vmatpush1.bf16.msra.mxu0 0
  %331 = vmatprep.subr.bf16.mxu0 0
  %332 = vmatpush1.bf16.msra.mxu0 0
  %333 = vmatprep.subr.bf16.mxu0 0
  %334 = vmatpush1.bf16.msra.mxu0 0
  %335 = vmatprep.subr.bf16.mxu0 0
  %336 = vmatpush1.bf16.msra.mxu0 0
  %337 = vmatprep.subr.bf16.mxu0 0
  %338 = vmatpush1.bf16.msra.mxu0 0
  %339 = vmatprep.subr.bf16.mxu0 0
  %340 = vmatpush1.bf16.msra.mxu0 0
  %341 = vmatprep.subr.bf16.mxu0 0
  %342 = vmatpush1.bf16.msra.mxu0 0
  %343 = vmatprep.subr.bf16.mxu0 0
  %344 = vmatpush1.bf16.msra.mxu0 0
  %345 = vmatprep.subr.bf16.mxu0 0
  %346 = vmatpush1.bf16.msra.mxu0 0
  %347 = vmatprep.subr.bf16.mxu0 0
  %348 = vmatpush1.bf16.msra.mxu0 0
  %349 = vmatprep.mubr.bf16.mxu0 0
  %350 = vmatmul.mubr.bf16.gmra.mrb[0].mxu0 %v259
  %v351 = vpop.f32.mrb[0].mxu0
  %v352 = vadd.f32 %v190, %v351
  %v353 = vpop.f32.mrb[0].mxu0
  %v354 = vadd.f32 %v192, %v353
  %v355 = vpop.f32.mrb[0].mxu0
  %v356 = vadd.f32 %v194, %v355
  %v357 = vpop.f32.mrb[0].mxu0
  %v358 = vadd.f32 %v196, %v357
  %359 = vmatprep.mubr.bf16.mxu0 0
  %360 = vmatmul.mubr.bf16.gmra.mrb[0].mxu0 %v262
  %v361 = vpop.f32.mrb[0].mxu0
  %v362 = vadd.f32 %v200, %v361
  %v363 = vpop.f32.mrb[0].mxu0
  %v364 = vadd.f32 %v202, %v363
  %v365 = vpop.f32.mrb[0].mxu0
  %v366 = vadd.f32 %v204, %v365
  %v367 = vpop.f32.mrb[0].mxu0
  %v368 = vadd.f32 %v206, %v367
  %369 = vdwg.mxu0
  %v370 = vld [vmem:[%s4] sm:$0xff]
  %v371 = vld [vmem:[%s4 + $0x8] sm:$0xff]
  %v372 = vld [vmem:[%s4 + $0x10] sm:$0xff]
  %v373 = vld [vmem:[%s4 + $0x18] sm:$0xff]
  %375 = vset.pattern.permute.xlu0 0
  %376 = vperm.xlu0 %375, %v370
  %v377 = vpop.permute.xlu0 %376
  %380 = vset.pattern.permute.xlu0 0
  %381 = vperm.xlu0 %380, %v371
  %v382 = vpop.permute.xlu0 %381
  %385 = vset.pattern.permute.xlu0 0
  %386 = vperm.xlu0 %385, %v372
  %v387 = vpop.permute.xlu0 %386
  %390 = vset.pattern.permute.xlu0 0
  %391 = vperm.xlu0 %390, %v373
  %v392 = vpop.permute.xlu0 %391
  %v394 = vadd.f32 %v299, %v377
  %v395 = vadd.f32 %v301, %v377
  %v396 = vadd.f32 %v352, %v377
  %v397 = vadd.f32 %v354, %v377
  %v398 = vadd.f32 %v303, %v382
  %v399 = vadd.f32 %v305, %v382
  %v400 = vadd.f32 %v356, %v382
  %v401 = vadd.f32 %v358, %v382
  %v402 = vadd.f32 %v309, %v387
  %v403 = vadd.f32 %v311, %v387
  %v404 = vadd.f32 %v362, %v387
  %v405 = vadd.f32 %v364, %v387
  %v406 = vadd.f32 %v313, %v392
  %v407 = vadd.f32 %v315, %v392
  %v408 = vadd.f32 %v366, %v392
  %v409 = vadd.f32 %v368, %v392
  %v410 = vmax.f32 %v394, 0.0
  %v411 = vmax.f32 %v395, 0.0
  %v412 = vmax.f32 %v396, 0.0
  %v413 = vmax.f32 %v397, 0.0
  %v414 = vmax.f32 %v398, 0.0
  %v415 = vmax.f32 %v399, 0.0
  %v416 = vmax.f32 %v400, 0.0
  %v417 = vmax.f32 %v401, 0.0
  %v418 = vmax.f32 %v402, 0.0
  %v419 = vmax.f32 %v403, 0.0
  %v420 = vmax.f32 %v404, 0.0
  %v421 = vmax.f32 %v405, 0.0
  %v422 = vmax.f32 %v406, 0.0
  %v423 = vmax.f32 %v407, 0.0
  %v424 = vmax.f32 %v408, 0.0
  %v425 = vmax.f32 %v409, 0.0
  %v426 = vpack.c.bf16 %v414, %v410
  %v427 = vpack.c.bf16 %v415, %v411
  %v428 = vpack.c.bf16 %v416, %v412
  %v429 = vpack.c.bf16 %v417, %v413
  %v430 = vpack.c.bf16 %v422, %v418
  %v431 = vpack.c.bf16 %v423, %v419
  %v432 = vpack.c.bf16 %v424, %v420
  %v433 = vpack.c.bf16 %v425, %v421
  %v442 = vunpack.c.l.b16 %v426
  %v443 = vunpack.c.l.b16 %v427
  %v444 = vunpack.c.l.b16 %v428
  %v445 = vunpack.c.l.b16 %v429
  %v446 = vunpack.c.h.b16 %v426
  %v447 = vunpack.c.h.b16 %v427
  %v448 = vunpack.c.h.b16 %v428
  %v449 = vunpack.c.h.b16 %v429
  %v450 = vunpack.c.l.b16 %v430
  %v451 = vunpack.c.l.b16 %v431
  %v452 = vunpack.c.l.b16 %v432
  %v453 = vunpack.c.l.b16 %v433
  %v454 = vunpack.c.h.b16 %v430
  %v455 = vunpack.c.h.b16 %v431
  %v456 = vunpack.c.h.b16 %v432
  %v457 = vunpack.c.h.b16 %v433
  %v458 = vpack.c.b16 %v443, %v442
  %v459 = vpack.c.b16 %v445, %v444
  %v460 = vpack.c.b16 %v447, %v446
  %v461 = vpack.c.b16 %v449, %v448
  %v462 = vpack.c.b16 %v451, %v450
  %v463 = vpack.c.b16 %v453, %v452
  %v464 = vpack.c.b16 %v455, %v454
  %v465 = vpack.c.b16 %v457, %v456
  %474 = vst [vmem:[%s5] sm:$0xff] %v458
  %475 = vst [vmem:[%s5 + $0x8] sm:$0xff] %v459
  %476 = vst [vmem:[%s5 + $0x10] sm:$0xff] %v460
  %477 = vst [vmem:[%s5 + $0x18] sm:$0xff] %v461
  %478 = vst [vmem:[%s5 + $0x20] sm:$0xff] %v462
  %479 = vst [vmem:[%s5 + $0x28] sm:$0xff] %v463
  %480 = vst [vmem:[%s5 + $0x30] sm:$0xff] %v464
  %481 = vst [vmem:[%s5 + $0x38] sm:$0xff] %v465
  // Predicated region
  $region22: #{_forward_core.3} parent=0 // pred_check
    _
  $region23: #{_forward_core.3} parent=0 // pred_check_branch
    %483 = sbr.rel (0) target = $region25
  $region24: #{_forward_core.3} parent=0 // pred_region
    _
  $region25: #{_forward_core.3} parent=0 // pred_fallthru
    _
  // Predicated region
  $region26: #{_forward_core.3} parent=0 // pred_check
    _
  $region27: #{_forward_core.3} parent=0 // pred_check_branch
    %485 = sbr.rel (0) target = $region29
  $region28: #{_forward_core.3} parent=0 // pred_region
    _
  $region29: #{_forward_core.3} parent=0 // pred_fallthru
    _

</llo_original>
